<compile_context>
chip_gen: v7x
topology: tpu7x:2x2x1
jax: 0.10.0
libtpu: 0.0.40
codegen_flags: <defaults>
</compile_context>

<pallas_src>
import functools

import jax
import jax.numpy as jnp
import numpy as np
from jax import lax
from jax.experimental import pallas as pl
from jax.experimental.pallas import tpu as pltpu


def bdas_kernel(x_ref, rot_ref, rot_t_ref, bmask_ref, out_ref,
                rot_sc, mix_sc, *, n_swap_rows, mix_chunk):
    B, TS, D = x_ref.shape

    # --- forward rotation: one tall (B*TS, D) x (D, D) bf16 MXU matmul ------
    x_flat = x_ref[...].reshape(B * TS, D).astype(jnp.bfloat16)
    rot_sc[...] = jnp.dot(
        x_flat, rot_ref[...], preferred_element_type=jnp.float32
    ).reshape(B, TS, D)

    # --- mix with batch-rolled activations -----------------------------------
    # mean_i[(1-m_i)*rot + m_i*inj_i] = rot + sum_i (m_i/n) * (inj_i - rot)
    # bmask_ref already holds the gathered, 1/n-pre-scaled masks, one (1, D)
    # row per (swap row i, batch row b): all addressing below is static.
    # Chunk the sequence tile so acc / rot_b / inj stay a few vregs each; every
    # chunk's accumulator is stored to mix_sc before the next chunk starts.
    n_chunks = TS // mix_chunk
    for b in range(B):
        for c in range(n_chunks):
            off = c * mix_chunk                              # static offset
            rot_b = rot_sc[b, pl.ds(off, mix_chunk), :]      # (CH, D) f32
            acc = rot_b
            for i in range(n_swap_rows):
                src = (b - (i + 1)) % B                      # torch.roll(., i+1, 0)
                inj = rot_sc[src, pl.ds(off, mix_chunk), :]
                bm = bmask_ref[pl.ds(i * B + b, 1), :]       # (1, D), pre-scaled
                acc = acc + bm * (inj - rot_b)
            mix_sc[b, pl.ds(off, mix_chunk), :] = acc.astype(mix_sc.dtype)

    # --- inverse rotation: one tall bf16 matmul against precomputed R^T ------
    mix_flat = mix_sc[...].reshape(B * TS, D)                # already bf16
    out = jnp.dot(mix_flat, rot_t_ref[...], preferred_element_type=jnp.float32)
    out_ref[...] = out.reshape(B, TS, D).astype(out_ref.dtype)


def _vmem_budget_bytes():
    """Generation-aware VMEM budget (~75% of physical per-core VMEM)."""
    try:
        cap = pltpu.get_tpu_info().vmem_capacity_bytes   # 64 MiB v7x, 128 MiB v5e/v6e
    except Exception:
        cap = 64 * 1024 * 1024                           # conservative fallback
    return min(int(cap * 0.75), 100 * 1024 * 1024)


def _choose_seq_tile(B, S, D, x_bytes, out_bytes, budget):
    """Largest sequence tile whose steady-state footprint fits the budget,
    preferring B*tile >= 512 (MXU M dim) and >= 4 grid steps (v7x: 2 TCs)."""
    def footprint(ts):
        per = B * ts * D
        return (2 * per * x_bytes          # x tile, double-buffered
                + 2 * per * out_bytes      # out tile, double-buffered
                + per * 4                  # rot_sc (f32)
                + per * 2                  # mix_sc (bf16)
                + 2 * D * D * 2)           # R + R^T (bf16, single resident copy)

    cands = [t for t in range(8, S + 1, 8) if S % t == 0] or [S]
    fitting = [t for t in cands if footprint(t) <= budget] or [cands[0]]
    for pred in (lambda t: B * t >= 512 and S // t >= 4,
                 lambda t: B * t >= 512):
        good = [t for t in fitting if pred(t)]
        if good:
            return min(good)
    return max(fitting)


def boundless_das_forward(x, rotate_weight, delta_boundaries, temperature, swaps,
                          *, seq_tile=None):
    B, S, D = x.shape
    assert S % 8 == 0, "seq_len must be a multiple of 8"
    n_categories = delta_boundaries.shape[0]
    n_swap_rows = swaps.shape[0]
    assert n_swap_rows >= 1

    budget = _vmem_budget_bytes()
    if seq_tile is None:
        seq_tile = _choose_seq_tile(B, S, D, x.dtype.itemsize, x.dtype.itemsize,
                                    budget)
    assert S % seq_tile == 0 and seq_tile % 8 == 0

    # VPU chunk of the sequence tile for the mixing loop (bounds vreg live ranges).
    max_chunk = max(8, min(64, (16384 // D) // 8 * 8))
    mix_chunk = next(c for c in range(max_chunk, 7, -8) if seq_tile % c == 0)

    # ---- grid-invariant precompute (tiny XLA ops, hoisted out of the kernel) ----
    # boundary masks -> per-(swap row, batch row) gather -> pre-scale by 1/n_swap.
    delta = delta_boundaries.astype(jnp.float32)
    temp = jnp.asarray(temperature, jnp.float32)
    bounds = jnp.concatenate(
        [jnp.zeros((1,), jnp.float32), jnp.cumsum(jnp.clip(delta, 0.01))]
    ) * (float(D) / float(n_categories))
    pop = jnp.arange(D, dtype=jnp.float32)
    inv_t = 1.0 / temp
    masks = (jax.nn.sigmoid((pop[None, :] - bounds[:-1, None]) * inv_t)
             * jax.nn.sigmoid((bounds[1:, None] - pop[None, :]) * inv_t))  # (n_cat, D)
    bmask = (masks[swaps.astype(jnp.int32)] * (1.0 / n_swap_rows)
             ).reshape(n_swap_rows * B, D)
    rows = n_swap_rows * B
    rows_pad = -(-rows // 8) * 8
    if rows_pad != rows:
        bmask = jnp.pad(bmask, ((0, rows_pad - rows), (0, 0)))  # pad rows never read

    rot_bf = rotate_weight.astype(jnp.bfloat16)
    rot_t_bf = rotate_weight.T.astype(jnp.bfloat16)     # avoid in-kernel transpose

    kernel = functools.partial(bdas_kernel,
                               n_swap_rows=n_swap_rows,
                               mix_chunk=mix_chunk)

    return pl.pallas_call(
        kernel,
        out_shape=jax.ShapeDtypeStruct((B, S, D), x.dtype),
        grid=(S // seq_tile,),
        in_specs=[
            pl.BlockSpec((B, seq_tile, D), lambda s: (0, s, 0)),      # x tile (pipelined)
            pl.BlockSpec(memory_space=pltpu.MemorySpace.VMEM),        # R   (bf16, resident, 1 copy)
            pl.BlockSpec(memory_space=pltpu.MemorySpace.VMEM),        # R^T (bf16, resident, 1 copy)
            pl.BlockSpec(memory_space=pltpu.MemorySpace.VMEM),        # pre-gathered boundary masks
        ],
        out_specs=pl.BlockSpec((B, seq_tile, D), lambda s: (0, s, 0)),
        scratch_shapes=[
            pltpu.VMEM((B, seq_tile, D), jnp.float32),                # rotated
            pltpu.VMEM((B, seq_tile, D), jnp.bfloat16),               # mixed (bf16)
        ],
        compiler_params=pltpu.CompilerParams(
            dimension_semantics=("parallel",),
            vmem_limit_bytes=budget,
        ),
    )(x, rot_bf, rot_t_bf, bmask)


def bdas_reference(x, R, delta, temperature, swaps):
    """Pure-JAX reference of the same forward path (for correctness check)."""
    B, S, D = x.shape
    n_cat = delta.shape[0]
    bounds = jnp.concatenate(
        [jnp.zeros((1,), jnp.float32), jnp.cumsum(jnp.clip(delta, 0.01))]
    ) * (D / n_cat)
    pop = jnp.arange(D, dtype=jnp.float32)
    masks = (jax.nn.sigmoid((pop[None, :] - bounds[:-1, None]) / temperature)
             * jax.nn.sigmoid((bounds[1:, None] - pop[None, :]) / temperature))
    rotated = jnp.einsum('bsd,de->bse', x, R, precision=lax.Precision.HIGHEST)
    mixes = []
    for i in range(swaps.shape[0]):
        bmask = masks[swaps[i]][:, None, :]                 # (B, 1, D)
        injected = jnp.roll(rotated, i + 1, axis=0)
        mixes.append((1.0 - bmask) * rotated + bmask * injected)
    avg = jnp.mean(jnp.stack(mixes), axis=0)
    return jnp.einsum('bsd,ed->bse', avg, R, precision=lax.Precision.HIGHEST)


if __name__ == "__main__":
    B, S, D = 4, 512, 128        # batch, seq_len, d_embd  (B*seq_tile >= 512)
    n_sensors = 2
    n_categories = n_sensors + 2
    n_swap_rows = n_sensors      # eval-style batch_data['swaps']: one row per sensor

    key = jax.random.PRNGKey(0)
    kx, kw, kd, ks = jax.random.split(key, 4)

    x = jax.random.normal(kx, (B, S, D), jnp.float32)

    # Orthogonal rotation weight (torch.nn.init.orthogonal_ analogue: QR of a Gaussian).
    A = jax.random.normal(kw, (D, D), jnp.float32)
    Q, Rq = jnp.linalg.qr(A)
    rotate_weight = (Q * jnp.sign(jnp.diag(Rq))[None, :]).astype(jnp.float32)

    # __init__ uses ones / 50.0; deltas are perturbed and a sharper temperature is used
    # so the per-category boundary masks are distinguishable in the correctness check.
    delta_boundaries = (jnp.ones((n_categories,), jnp.float32)
                        + 0.5 * jax.random.uniform(kd, (n_categories,), jnp.float32))
    temperature = jnp.float32(5.0)

    swaps = jax.random.randint(ks, (n_swap_rows, B), 0, n_categories, dtype=jnp.int32)

    out = boundless_das_forward(x, rotate_weight, delta_boundaries, temperature, swaps)
    out = jax.block_until_ready(out)

    ref = bdas_reference(x, rotate_weight, delta_boundaries, temperature, swaps)
    # Tolerance covers bf16 MXU operands vs the f32 HIGHEST-precision reference.
    np.testing.assert_allclose(np.asarray(out), np.asarray(ref), atol=6e-2, rtol=6e-2)

    print("KERNEL_OK")
</pallas_src>

<mosaic_0001>
module attributes {stable_mosaic.version = 11 : i64} {
  func.func @bdas_kernel(%arg0: i32, %arg1: memref<4x128x128xf32, #tpu.memory_space<vmem>>, %arg2: memref<128x128xbf16, #tpu.memory_space<vmem>>, %arg3: memref<128x128xbf16, #tpu.memory_space<vmem>>, %arg4: memref<8x128xf32, #tpu.memory_space<vmem>>, %arg5: memref<4x128x128xf32, #tpu.memory_space<vmem>>, %arg6: memref<4x128x128xf32, #tpu.memory_space<vmem>>, %arg7: memref<4x128x128xbf16, #tpu.memory_space<vmem>>) attributes {dimension_semantics = [#tpu.dimension_semantics<parallel>], iteration_bounds = array<i64: 4>, scalar_prefetch = 0 : i64, scratch_operands = 2 : i64, tpu.core_type = #tpu.core_type<tc>, window_params = [{transform_indices = @transform_0, window_bounds = array<i64: 4, 128, 128>}, {pipeline_mode = #tpu.pipeline_mode<synchronous>, transform_indices = @transform_1, window_bounds = array<i64: 128, 128>}, {pipeline_mode = #tpu.pipeline_mode<synchronous>, transform_indices = @transform_2, window_bounds = array<i64: 128, 128>}, {pipeline_mode = #tpu.pipeline_mode<synchronous>, transform_indices = @transform_3, window_bounds = array<i64: 8, 128>}, {transform_indices = @transform_4, window_bounds = array<i64: 4, 128, 128>}]} {
    %c0 = arith.constant 0 : index
    %c0_0 = arith.constant 0 : index
    %c0_1 = arith.constant 0 : index
    %0 = vector.load %arg1[%c0, %c0_0, %c0_1] : memref<4x128x128xf32, #tpu.memory_space<vmem>>, vector<4x128x128xf32>
    %1 = vector.shape_cast %0 : vector<4x128x128xf32> to vector<512x128xf32>
    %2 = arith.truncf %1 : vector<512x128xf32> to vector<512x128xbf16>
    %c0_2 = arith.constant 0 : index
    %c0_3 = arith.constant 0 : index
    %3 = vector.load %arg2[%c0_2, %c0_3] : memref<128x128xbf16, #tpu.memory_space<vmem>>, vector<128x128xbf16>
    %cst = arith.constant dense<0.000000e+00> : vector<512x128xf32>
    %4 = tpu.matmul %2, %3, %cst {dimension_numbers = #tpu.dot_dimension_numbers<[1], [0], [0], [1], [0, 0, 1, 1], [], []>} : vector<512x128xbf16>, vector<128x128xbf16>, vector<512x128xf32> -> vector<512x128xf32>
    %5 = vector.shape_cast %4 : vector<512x128xf32> to vector<4x128x128xf32>
    %c0_4 = arith.constant 0 : index
    %c0_5 = arith.constant 0 : index
    %c0_6 = arith.constant 0 : index
    %6 = vector.load %arg6[%c0_4, %c0_5, %c0_6] : memref<4x128x128xf32, #tpu.memory_space<vmem>>, vector<4x128x128xf32>
    tpu.vector_store %arg6[%c0_4, %c0_5, %c0_6], %5 {strides = array<i32>} : memref<4x128x128xf32, #tpu.memory_space<vmem>>, vector<4x128x128xf32>,
    %c0_7 = arith.constant 0 : index
    %c0_8 = arith.constant 0 : index
    %c0_9 = arith.constant 0 : index
    %7 = vector.load %arg6[%c0_7, %c0_8, %c0_9] : memref<4x128x128xf32, #tpu.memory_space<vmem>>, vector<1x64x128xf32>
    %8 = vector.shape_cast %7 : vector<1x64x128xf32> to vector<64x128xf32>
    %c3 = arith.constant 3 : index
    %c0_10 = arith.constant 0 : index
    %c0_11 = arith.constant 0 : index
    %9 = vector.load %arg6[%c3, %c0_10, %c0_11] : memref<4x128x128xf32, #tpu.memory_space<vmem>>, vector<1x64x128xf32>
    %10 = vector.shape_cast %9 : vector<1x64x128xf32> to vector<64x128xf32>
    %c0_12 = arith.constant 0 : index
    %c0_13 = arith.constant 0 : index
    %11 = vector.load %arg4[%c0_12, %c0_13] : memref<8x128xf32, #tpu.memory_space<vmem>>, vector<1x128xf32>
    %12 = arith.subf %10, %8 : vector<64x128xf32>
    %13 = vector.broadcast %11 : vector<1x128xf32> to vector<64x128xf32>
    %14 = arith.mulf %13, %12 : vector<64x128xf32>
    %15 = arith.addf %8, %14 : vector<64x128xf32>
    %c2 = arith.constant 2 : index
    %c0_14 = arith.constant 0 : index
    %c0_15 = arith.constant 0 : index
    %16 = vector.load %arg6[%c2, %c0_14, %c0_15] : memref<4x128x128xf32, #tpu.memory_space<vmem>>, vector<1x64x128xf32>
    %17 = vector.shape_cast %16 : vector<1x64x128xf32> to vector<64x128xf32>
    %c4 = arith.constant 4 : index
    %c0_16 = arith.constant 0 : index
    %18 = vector.load %arg4[%c4, %c0_16] : memref<8x128xf32, #tpu.memory_space<vmem>>, vector<1x128xf32>
    %19 = arith.subf %17, %8 : vector<64x128xf32>
    %20 = vector.broadcast %18 : vector<1x128xf32> to vector<64x128xf32>
    %21 = arith.mulf %20, %19 : vector<64x128xf32>
    %22 = arith.addf %15, %21 : vector<64x128xf32>
    %23 = arith.truncf %22 : vector<64x128xf32> to vector<64x128xbf16>
    %c0_17 = arith.constant 0 : index
    %c0_18 = arith.constant 0 : index
    %c0_19 = arith.constant 0 : index
    %24 = vector.load %arg7[%c0_17, %c0_18, %c0_19] : memref<4x128x128xbf16, #tpu.memory_space<vmem>>, vector<1x64x128xbf16>
    %25 = vector.shape_cast %24 : vector<1x64x128xbf16> to vector<64x128xbf16>
    %26 = vector.shape_cast %23 : vector<64x128xbf16> to vector<1x64x128xbf16>
    tpu.vector_store %arg7[%c0_17, %c0_18, %c0_19], %26 {strides = array<i32>} : memref<4x128x128xbf16, #tpu.memory_space<vmem>>, vector<1x64x128xbf16>,
    %c0_20 = arith.constant 0 : index
    %c64 = arith.constant 64 : index
    %c0_21 = arith.constant 0 : index
    %27 = vector.load %arg6[%c0_20, %c64, %c0_21] : memref<4x128x128xf32, #tpu.memory_space<vmem>>, vector<1x64x128xf32>
    %28 = vector.shape_cast %27 : vector<1x64x128xf32> to vector<64x128xf32>
    %c3_22 = arith.constant 3 : index
    %c64_23 = arith.constant 64 : index
    %c0_24 = arith.constant 0 : index
    %29 = vector.load %arg6[%c3_22, %c64_23, %c0_24] : memref<4x128x128xf32, #tpu.memory_space<vmem>>, vector<1x64x128xf32>
    %30 = vector.shape_cast %29 : vector<1x64x128xf32> to vector<64x128xf32>
    %c0_25 = arith.constant 0 : index
    %c0_26 = arith.constant 0 : index
    %31 = vector.load %arg4[%c0_25, %c0_26] : memref<8x128xf32, #tpu.memory_space<vmem>>, vector<1x128xf32>
    %32 = arith.subf %30, %28 : vector<64x128xf32>
    %33 = vector.broadcast %31 : vector<1x128xf32> to vector<64x128xf32>
    %34 = arith.mulf %33, %32 : vector<64x128xf32>
    %35 = arith.addf %28, %34 : vector<64x128xf32>
    %c2_27 = arith.constant 2 : index
    %c64_28 = arith.constant 64 : index
    %c0_29 = arith.constant 0 : index
    %36 = vector.load %arg6[%c2_27, %c64_28, %c0_29] : memref<4x128x128xf32, #tpu.memory_space<vmem>>, vector<1x64x128xf32>
    %37 = vector.shape_cast %36 : vector<1x64x128xf32> to vector<64x128xf32>
    %c4_30 = arith.constant 4 : index
    %c0_31 = arith.constant 0 : index
    %38 = vector.load %arg4[%c4_30, %c0_31] : memref<8x128xf32, #tpu.memory_space<vmem>>, vector<1x128xf32>
    %39 = arith.subf %37, %28 : vector<64x128xf32>
    %40 = vector.broadcast %38 : vector<1x128xf32> to vector<64x128xf32>
    %41 = arith.mulf %40, %39 : vector<64x128xf32>
    %42 = arith.addf %35, %41 : vector<64x128xf32>
    %43 = arith.truncf %42 : vector<64x128xf32> to vector<64x128xbf16>
    %c0_32 = arith.constant 0 : index
    %c64_33 = arith.constant 64 : index
    %c0_34 = arith.constant 0 : index
    %44 = vector.load %arg7[%c0_32, %c64_33, %c0_34] : memref<4x128x128xbf16, #tpu.memory_space<vmem>>, vector<1x64x128xbf16>
    %45 = vector.shape_cast %44 : vector<1x64x128xbf16> to vector<64x128xbf16>
    %46 = vector.shape_cast %43 : vector<64x128xbf16> to vector<1x64x128xbf16>
    tpu.vector_store %arg7[%c0_32, %c64_33, %c0_34], %46 {strides = array<i32>} : memref<4x128x128xbf16, #tpu.memory_space<vmem>>, vector<1x64x128xbf16>,
    %c1 = arith.constant 1 : index
    %c0_35 = arith.constant 0 : index
    %c0_36 = arith.constant 0 : index
    %47 = vector.load %arg6[%c1, %c0_35, %c0_36] : memref<4x128x128xf32, #tpu.memory_space<vmem>>, vector<1x64x128xf32>
    %48 = vector.shape_cast %47 : vector<1x64x128xf32> to vector<64x128xf32>
    %c0_37 = arith.constant 0 : index
    %c0_38 = arith.constant 0 : index
    %c0_39 = arith.constant 0 : index
    %49 = vector.load %arg6[%c0_37, %c0_38, %c0_39] : memref<4x128x128xf32, #tpu.memory_space<vmem>>, vector<1x64x128xf32>
    %50 = vector.shape_cast %49 : vector<1x64x128xf32> to vector<64x128xf32>
    %c1_40 = arith.constant 1 : index
    %c0_41 = arith.constant 0 : index
    %51 = vector.load %arg4[%c1_40, %c0_41] : memref<8x128xf32, #tpu.memory_space<vmem>>, vector<1x128xf32>
    %52 = arith.subf %50, %48 : vector<64x128xf32>
    %53 = vector.broadcast %51 : vector<1x128xf32> to vector<64x128xf32>
    %54 = arith.mulf %53, %52 : vector<64x128xf32>
    %55 = arith.addf %48, %54 : vector<64x128xf32>
    %c3_42 = arith.constant 3 : index
    %c0_43 = arith.constant 0 : index
    %c0_44 = arith.constant 0 : index
    %56 = vector.load %arg6[%c3_42, %c0_43, %c0_44] : memref<4x128x128xf32, #tpu.memory_space<vmem>>, vector<1x64x128xf32>
    %57 = vector.shape_cast %56 : vector<1x64x128xf32> to vector<64x128xf32>
    %c5 = arith.constant 5 : index
    %c0_45 = arith.constant 0 : index
    %58 = vector.load %arg4[%c5, %c0_45] : memref<8x128xf32, #tpu.memory_space<vmem>>, vector<1x128xf32>
    %59 = arith.subf %57, %48 : vector<64x128xf32>
    %60 = vector.broadcast %58 : vector<1x128xf32> to vector<64x128xf32>
    %61 = arith.mulf %60, %59 : vector<64x128xf32>
    %62 = arith.addf %55, %61 : vector<64x128xf32>
    %63 = arith.truncf %62 : vector<64x128xf32> to vector<64x128xbf16>
    %c1_46 = arith.constant 1 : index
    %c0_47 = arith.constant 0 : index
    %c0_48 = arith.constant 0 : index
    %64 = vector.load %arg7[%c1_46, %c0_47, %c0_48] : memref<4x128x128xbf16, #tpu.memory_space<vmem>>, vector<1x64x128xbf16>
    %65 = vector.shape_cast %64 : vector<1x64x128xbf16> to vector<64x128xbf16>
    %66 = vector.shape_cast %63 : vector<64x128xbf16> to vector<1x64x128xbf16>
    tpu.vector_store %arg7[%c1_46, %c0_47, %c0_48], %66 {strides = array<i32>} : memref<4x128x128xbf16, #tpu.memory_space<vmem>>, vector<1x64x128xbf16>,
    %c1_49 = arith.constant 1 : index
    %c64_50 = arith.constant 64 : index
    %c0_51 = arith.constant 0 : index
    %67 = vector.load %arg6[%c1_49, %c64_50, %c0_51] : memref<4x128x128xf32, #tpu.memory_space<vmem>>, vector<1x64x128xf32>
    %68 = vector.shape_cast %67 : vector<1x64x128xf32> to vector<64x128xf32>
    %c0_52 = arith.constant 0 : index
    %c64_53 = arith.constant 64 : index
    %c0_54 = arith.constant 0 : index
    %69 = vector.load %arg6[%c0_52, %c64_53, %c0_54] : memref<4x128x128xf32, #tpu.memory_space<vmem>>, vector<1x64x128xf32>
    %70 = vector.shape_cast %69 : vector<1x64x128xf32> to vector<64x128xf32>
    %c1_55 = arith.constant 1 : index
    %c0_56 = arith.constant 0 : index
    %71 = vector.load %arg4[%c1_55, %c0_56] : memref<8x128xf32, #tpu.memory_space<vmem>>, vector<1x128xf32>
    %72 = arith.subf %70, %68 : vector<64x128xf32>
    %73 = vector.broadcast %71 : vector<1x128xf32> to vector<64x128xf32>
    %74 = arith.mulf %73, %72 : vector<64x128xf32>
    %75 = arith.addf %68, %74 : vector<64x128xf32>
    %c3_57 = arith.constant 3 : index
    %c64_58 = arith.constant 64 : index
    %c0_59 = arith.constant 0 : index
    %76 = vector.load %arg6[%c3_57, %c64_58, %c0_59] : memref<4x128x128xf32, #tpu.memory_space<vmem>>, vector<1x64x128xf32>
    %77 = vector.shape_cast %76 : vector<1x64x128xf32> to vector<64x128xf32>
    %c5_60 = arith.constant 5 : index
    %c0_61 = arith.constant 0 : index
    %78 = vector.load %arg4[%c5_60, %c0_61] : memref<8x128xf32, #tpu.memory_space<vmem>>, vector<1x128xf32>
    %79 = arith.subf %77, %68 : vector<64x128xf32>
    %80 = vector.broadcast %78 : vector<1x128xf32> to vector<64x128xf32>
    %81 = arith.mulf %80, %79 : vector<64x128xf32>
    %82 = arith.addf %75, %81 : vector<64x128xf32>
    %83 = arith.truncf %82 : vector<64x128xf32> to vector<64x128xbf16>
    %c1_62 = arith.constant 1 : index
    %c64_63 = arith.constant 64 : index
    %c0_64 = arith.constant 0 : index
    %84 = vector.load %arg7[%c1_62, %c64_63, %c0_64] : memref<4x128x128xbf16, #tpu.memory_space<vmem>>, vector<1x64x128xbf16>
    %85 = vector.shape_cast %84 : vector<1x64x128xbf16> to vector<64x128xbf16>
    %86 = vector.shape_cast %83 : vector<64x128xbf16> to vector<1x64x128xbf16>
    tpu.vector_store %arg7[%c1_62, %c64_63, %c0_64], %86 {strides = array<i32>} : memref<4x128x128xbf16, #tpu.memory_space<vmem>>, vector<1x64x128xbf16>,
    %c2_65 = arith.constant 2 : index
    %c0_66 = arith.constant 0 : index
    %c0_67 = arith.constant 0 : index
    %87 = vector.load %arg6[%c2_65, %c0_66, %c0_67] : memref<4x128x128xf32, #tpu.memory_space<vmem>>, vector<1x64x128xf32>
    %88 = vector.shape_cast %87 : vector<1x64x128xf32> to vector<64x128xf32>
    %c1_68 = arith.constant 1 : index
    %c0_69 = arith.constant 0 : index
    %c0_70 = arith.constant 0 : index
    %89 = vector.load %arg6[%c1_68, %c0_69, %c0_70] : memref<4x128x128xf32, #tpu.memory_space<vmem>>, vector<1x64x128xf32>
    %90 = vector.shape_cast %89 : vector<1x64x128xf32> to vector<64x128xf32>
    %c2_71 = arith.constant 2 : index
    %c0_72 = arith.constant 0 : index
    %91 = vector.load %arg4[%c2_71, %c0_72] : memref<8x128xf32, #tpu.memory_space<vmem>>, vector<1x128xf32>
    %92 = arith.subf %90, %88 : vector<64x128xf32>
    %93 = vector.broadcast %91 : vector<1x128xf32> to vector<64x128xf32>
    %94 = arith.mulf %93, %92 : vector<64x128xf32>
    %95 = arith.addf %88, %94 : vector<64x128xf32>
    %c0_73 = arith.constant 0 : index
    %c0_74 = arith.constant 0 : index
    %c0_75 = arith.constant 0 : index
    %96 = vector.load %arg6[%c0_73, %c0_74, %c0_75] : memref<4x128x128xf32, #tpu.memory_space<vmem>>, vector<1x64x128xf32>
    %97 = vector.shape_cast %96 : vector<1x64x128xf32> to vector<64x128xf32>
    %c6 = arith.constant 6 : index
    %c0_76 = arith.constant 0 : index
    %98 = vector.load %arg4[%c6, %c0_76] : memref<8x128xf32, #tpu.memory_space<vmem>>, vector<1x128xf32>
    %99 = arith.subf %97, %88 : vector<64x128xf32>
    %100 = vector.broadcast %98 : vector<1x128xf32> to vector<64x128xf32>
    %101 = arith.mulf %100, %99 : vector<64x128xf32>
    %102 = arith.addf %95, %101 : vector<64x128xf32>
    %103 = arith.truncf %102 : vector<64x128xf32> to vector<64x128xbf16>
    %c2_77 = arith.constant 2 : index
    %c0_78 = arith.constant 0 : index
    %c0_79 = arith.constant 0 : index
    %104 = vector.load %arg7[%c2_77, %c0_78, %c0_79] : memref<4x128x128xbf16, #tpu.memory_space<vmem>>, vector<1x64x128xbf16>
    %105 = vector.shape_cast %104 : vector<1x64x128xbf16> to vector<64x128xbf16>
    %106 = vector.shape_cast %103 : vector<64x128xbf16> to vector<1x64x128xbf16>
    tpu.vector_store %arg7[%c2_77, %c0_78, %c0_79], %106 {strides = array<i32>} : memref<4x128x128xbf16, #tpu.memory_space<vmem>>, vector<1x64x128xbf16>,
    %c2_80 = arith.constant 2 : index
    %c64_81 = arith.constant 64 : index
    %c0_82 = arith.constant 0 : index
    %107 = vector.load %arg6[%c2_80, %c64_81, %c0_82] : memref<4x128x128xf32, #tpu.memory_space<vmem>>, vector<1x64x128xf32>
    %108 = vector.shape_cast %107 : vector<1x64x128xf32> to vector<64x128xf32>
    %c1_83 = arith.constant 1 : index
    %c64_84 = arith.constant 64 : index
    %c0_85 = arith.constant 0 : index
    %109 = vector.load %arg6[%c1_83, %c64_84, %c0_85] : memref<4x128x128xf32, #tpu.memory_space<vmem>>, vector<1x64x128xf32>
    %110 = vector.shape_cast %109 : vector<1x64x128xf32> to vector<64x128xf32>
    %c2_86 = arith.constant 2 : index
    %c0_87 = arith.constant 0 : index
    %111 = vector.load %arg4[%c2_86, %c0_87] : memref<8x128xf32, #tpu.memory_space<vmem>>, vector<1x128xf32>
    %112 = arith.subf %110, %108 : vector<64x128xf32>
    %113 = vector.broadcast %111 : vector<1x128xf32> to vector<64x128xf32>
    %114 = arith.mulf %113, %112 : vector<64x128xf32>
    %115 = arith.addf %108, %114 : vector<64x128xf32>
    %c0_88 = arith.constant 0 : index
    %c64_89 = arith.constant 64 : index
    %c0_90 = arith.constant 0 : index
    %116 = vector.load %arg6[%c0_88, %c64_89, %c0_90] : memref<4x128x128xf32, #tpu.memory_space<vmem>>, vector<1x64x128xf32>
    %117 = vector.shape_cast %116 : vector<1x64x128xf32> to vector<64x128xf32>
    %c6_91 = arith.constant 6 : index
    %c0_92 = arith.constant 0 : index
    %118 = vector.load %arg4[%c6_91, %c0_92] : memref<8x128xf32, #tpu.memory_space<vmem>>, vector<1x128xf32>
    %119 = arith.subf %117, %108 : vector<64x128xf32>
    %120 = vector.broadcast %118 : vector<1x128xf32> to vector<64x128xf32>
    %121 = arith.mulf %120, %119 : vector<64x128xf32>
    %122 = arith.addf %115, %121 : vector<64x128xf32>
    %123 = arith.truncf %122 : vector<64x128xf32> to vector<64x128xbf16>
    %c2_93 = arith.constant 2 : index
    %c64_94 = arith.constant 64 : index
    %c0_95 = arith.constant 0 : index
    %124 = vector.load %arg7[%c2_93, %c64_94, %c0_95] : memref<4x128x128xbf16, #tpu.memory_space<vmem>>, vector<1x64x128xbf16>
    %125 = vector.shape_cast %124 : vector<1x64x128xbf16> to vector<64x128xbf16>
    %126 = vector.shape_cast %123 : vector<64x128xbf16> to vector<1x64x128xbf16>
    tpu.vector_store %arg7[%c2_93, %c64_94, %c0_95], %126 {strides = array<i32>} : memref<4x128x128xbf16, #tpu.memory_space<vmem>>, vector<1x64x128xbf16>,
    %c3_96 = arith.constant 3 : index
    %c0_97 = arith.constant 0 : index
    %c0_98 = arith.constant 0 : index
    %127 = vector.load %arg6[%c3_96, %c0_97, %c0_98] : memref<4x128x128xf32, #tpu.memory_space<vmem>>, vector<1x64x128xf32>
    %128 = vector.shape_cast %127 : vector<1x64x128xf32> to vector<64x128xf32>
    %c2_99 = arith.constant 2 : index
    %c0_100 = arith.constant 0 : index
    %c0_101 = arith.constant 0 : index
    %129 = vector.load %arg6[%c2_99, %c0_100, %c0_101] : memref<4x128x128xf32, #tpu.memory_space<vmem>>, vector<1x64x128xf32>
    %130 = vector.shape_cast %129 : vector<1x64x128xf32> to vector<64x128xf32>
    %c3_102 = arith.constant 3 : index
    %c0_103 = arith.constant 0 : index
    %131 = vector.load %arg4[%c3_102, %c0_103] : memref<8x128xf32, #tpu.memory_space<vmem>>, vector<1x128xf32>
    %132 = arith.subf %130, %128 : vector<64x128xf32>
    %133 = vector.broadcast %131 : vector<1x128xf32> to vector<64x128xf32>
    %134 = arith.mulf %133, %132 : vector<64x128xf32>
    %135 = arith.addf %128, %134 : vector<64x128xf32>
    %c1_104 = arith.constant 1 : index
    %c0_105 = arith.constant 0 : index
    %c0_106 = arith.constant 0 : index
    %136 = vector.load %arg6[%c1_104, %c0_105, %c0_106] : memref<4x128x128xf32, #tpu.memory_space<vmem>>, vector<1x64x128xf32>
    %137 = vector.shape_cast %136 : vector<1x64x128xf32> to vector<64x128xf32>
    %c7 = arith.constant 7 : index
    %c0_107 = arith.constant 0 : index
    %138 = vector.load %arg4[%c7, %c0_107] : memref<8x128xf32, #tpu.memory_space<vmem>>, vector<1x128xf32>
    %139 = arith.subf %137, %128 : vector<64x128xf32>
    %140 = vector.broadcast %138 : vector<1x128xf32> to vector<64x128xf32>
    %141 = arith.mulf %140, %139 : vector<64x128xf32>
    %142 = arith.addf %135, %141 : vector<64x128xf32>
    %143 = arith.truncf %142 : vector<64x128xf32> to vector<64x128xbf16>
    %c3_108 = arith.constant 3 : index
    %c0_109 = arith.constant 0 : index
    %c0_110 = arith.constant 0 : index
    %144 = vector.load %arg7[%c3_108, %c0_109, %c0_110] : memref<4x128x128xbf16, #tpu.memory_space<vmem>>, vector<1x64x128xbf16>
    %145 = vector.shape_cast %144 : vector<1x64x128xbf16> to vector<64x128xbf16>
    %146 = vector.shape_cast %143 : vector<64x128xbf16> to vector<1x64x128xbf16>
    tpu.vector_store %arg7[%c3_108, %c0_109, %c0_110], %146 {strides = array<i32>} : memref<4x128x128xbf16, #tpu.memory_space<vmem>>, vector<1x64x128xbf16>,
    %c3_111 = arith.constant 3 : index
    %c64_112 = arith.constant 64 : index
    %c0_113 = arith.constant 0 : index
    %147 = vector.load %arg6[%c3_111, %c64_112, %c0_113] : memref<4x128x128xf32, #tpu.memory_space<vmem>>, vector<1x64x128xf32>
    %148 = vector.shape_cast %147 : vector<1x64x128xf32> to vector<64x128xf32>
    %c2_114 = arith.constant 2 : index
    %c64_115 = arith.constant 64 : index
    %c0_116 = arith.constant 0 : index
    %149 = vector.load %arg6[%c2_114, %c64_115, %c0_116] : memref<4x128x128xf32, #tpu.memory_space<vmem>>, vector<1x64x128xf32>
    %150 = vector.shape_cast %149 : vector<1x64x128xf32> to vector<64x128xf32>
    %c3_117 = arith.constant 3 : index
    %c0_118 = arith.constant 0 : index
    %151 = vector.load %arg4[%c3_117, %c0_118] : memref<8x128xf32, #tpu.memory_space<vmem>>, vector<1x128xf32>
    %152 = arith.subf %150, %148 : vector<64x128xf32>
    %153 = vector.broadcast %151 : vector<1x128xf32> to vector<64x128xf32>
    %154 = arith.mulf %153, %152 : vector<64x128xf32>
    %155 = arith.addf %148, %154 : vector<64x128xf32>
    %c1_119 = arith.constant 1 : index
    %c64_120 = arith.constant 64 : index
    %c0_121 = arith.constant 0 : index
    %156 = vector.load %arg6[%c1_119, %c64_120, %c0_121] : memref<4x128x128xf32, #tpu.memory_space<vmem>>, vector<1x64x128xf32>
    %157 = vector.shape_cast %156 : vector<1x64x128xf32> to vector<64x128xf32>
    %c7_122 = arith.constant 7 : index
    %c0_123 = arith.constant 0 : index
    %158 = vector.load %arg4[%c7_122, %c0_123] : memref<8x128xf32, #tpu.memory_space<vmem>>, vector<1x128xf32>
    %159 = arith.subf %157, %148 : vector<64x128xf32>
    %160 = vector.broadcast %158 : vector<1x128xf32> to vector<64x128xf32>
    %161 = arith.mulf %160, %159 : vector<64x128xf32>
    %162 = arith.addf %155, %161 : vector<64x128xf32>
    %163 = arith.truncf %162 : vector<64x128xf32> to vector<64x128xbf16>
    %c3_124 = arith.constant 3 : index
    %c64_125 = arith.constant 64 : index
    %c0_126 = arith.constant 0 : index
    %164 = vector.load %arg7[%c3_124, %c64_125, %c0_126] : memref<4x128x128xbf16, #tpu.memory_space<vmem>>, vector<1x64x128xbf16>
    %165 = vector.shape_cast %164 : vector<1x64x128xbf16> to vector<64x128xbf16>
    %166 = vector.shape_cast %163 : vector<64x128xbf16> to vector<1x64x128xbf16>
    tpu.vector_store %arg7[%c3_124, %c64_125, %c0_126], %166 {strides = array<i32>} : memref<4x128x128xbf16, #tpu.memory_space<vmem>>, vector<1x64x128xbf16>,
    %c0_127 = arith.constant 0 : index
    %c0_128 = arith.constant 0 : index
    %c0_129 = arith.constant 0 : index
    %167 = vector.load %arg7[%c0_127, %c0_128, %c0_129] : memref<4x128x128xbf16, #tpu.memory_space<vmem>>, vector<4x128x128xbf16>
    %168 = vector.shape_cast %167 : vector<4x128x128xbf16> to vector<512x128xbf16>
    %c0_130 = arith.constant 0 : index
    %c0_131 = arith.constant 0 : index
    %169 = vector.load %arg3[%c0_130, %c0_131] : memref<128x128xbf16, #tpu.memory_space<vmem>>, vector<128x128xbf16>
    %cst_132 = arith.constant dense<0.000000e+00> : vector<512x128xf32>
    %170 = tpu.matmul %168, %169, %cst_132 {dimension_numbers = #tpu.dot_dimension_numbers<[1], [0], [0], [1], [0, 0, 1, 1], [], []>} : vector<512x128xbf16>, vector<128x128xbf16>, vector<512x128xf32> -> vector<512x128xf32>
    %171 = vector.shape_cast %170 : vector<512x128xf32> to vector<4x128x128xf32>
    %c0_133 = arith.constant 0 : index
    %c0_134 = arith.constant 0 : index
    %c0_135 = arith.constant 0 : index
    %172 = vector.load %arg5[%c0_133, %c0_134, %c0_135] : memref<4x128x128xf32, #tpu.memory_space<vmem>>, vector<4x128x128xf32>
    tpu.vector_store %arg5[%c0_133, %c0_134, %c0_135], %171 {strides = array<i32>} : memref<4x128x128xf32, #tpu.memory_space<vmem>>, vector<4x128x128xf32>,
    return
  }
  func.func @transform_0(%arg0: i32) -> (i32, i32, i32) {
    %c0_i32 = arith.constant 0 : i32
    %c0_i32_0 = arith.constant 0 : i32
    %c0_i32_1 = arith.constant 0 : i32
    return %c0_i32, %arg0, %c0_i32_0 : i32, i32, i32
  }
  func.func @transform_1(%arg0: i32) -> (i32, i32) {
    %c0_i32 = arith.constant 0 : i32
    %c0_i32_0 = arith.constant 0 : i32
    %c0_i32_1 = arith.constant 0 : i32
    return %c0_i32, %c0_i32_0 : i32, i32
  }
  func.func @transform_2(%arg0: i32) -> (i32, i32) {
    %c0_i32 = arith.constant 0 : i32
    %c0_i32_0 = arith.constant 0 : i32
    %c0_i32_1 = arith.constant 0 : i32
    return %c0_i32, %c0_i32_0 : i32, i32
  }
  func.func @transform_3(%arg0: i32) -> (i32, i32) {
    %c0_i32 = arith.constant 0 : i32
    %c0_i32_0 = arith.constant 0 : i32
    %c0_i32_1 = arith.constant 0 : i32
    return %c0_i32, %c0_i32_0 : i32, i32
  }
  func.func @transform_4(%arg0: i32) -> (i32, i32, i32) {
    %c0_i32 = arith.constant 0 : i32
    %c0_i32_0 = arith.constant 0 : i32
    %c0_i32_1 = arith.constant 0 : i32
    return %c0_i32, %arg0, %c0_i32_0 : i32, i32, i32
  }
}

</mosaic_0001>

<llo_original>
// kernel: tpu_custom_call.1
$region0: #{tpu_custom_call.1}
  #allocation0 [shape = 'u32[]', space=smem, size = 0x4, offset = 0x4, fixed_abs, tag = 'smem constant byte address 0x4 - core index']
  #allocation1 [shape = 'u32[144,128]{1,0:T(1,128)}', space=vmem, size = 0x12000, scoped, tag = 'internal scratch']
  #allocation2 [shape = 'f32[4,128,128]{2,1,0:T(8,128)}', space=vmem, size = 0x40000, scoped, tag = 'scratch operand']
  #allocation3 [shape = 'bf16[4,128,128]{2,1,0:T(16,128)(2,1)}', space=vmem, size = 0x20000, scoped, tag = 'scratch operand']
  #allocation11 [shape = 's32[]', space=sflag, size = 0x4, offset = 0, fixed_abs, tag = 'sflag constant byte address 0x0 - dummy sync flag']
  #allocation13 [shape = 's32[]', space=sflag, size = 0x4, offset = 0, fixed_abs, tag = 'sflag constant byte address 0x0 - dummy sync flag']
  %s0 = inlined_call_operand.hbm [shape: f32[4,512,128], index: 0, kind: input, shape index: {}]
  %s1 = inlined_call_operand.hbm [shape: bf16[128,128], index: 1, kind: input, shape index: {}]
  %s2 = inlined_call_operand.hbm [shape: bf16[128,128], index: 2, kind: input, shape index: {}]
  %s3 = inlined_call_operand.vmem [shape: f32[8,128], index: 3, kind: input, shape index: {}]
  %s4 = inlined_call_operand.hbm [shape: f32[4,512,128], index: 4, kind: output, shape index: {}]
  %s5 = sld [smem:[#allocation0]]
  $region61: #{tpu_custom_call.1} parent=0
    _
  %s7 = ssub.s32 1, %s5
  %s8 = scalar_select 0, %s7, %s5
  $region1: #{tpu_custom_call.1} parent=0
    #allocation4 [shape = 'u8[524288]{0}', space=vmem, size = 0x80000, scoped, tag = 'input window, operand 0']
    #allocation5 [shape = 's32[2]{0}', space=sflag, size = 0x8, scoped, tag = 'scoped memory for tpu_custom_call.1']
    #allocation6 [shape = 's32[2]{0}', space=sflag, size = 0x8, scoped, tag = 'scoped memory for tpu_custom_call.1']
    #allocation7 [shape = 'u8[32768]{0}', space=vmem, size = 0x8000, scoped, tag = 'input window, operand 1, single buffered']
    #allocation8 [shape = 's32[1]{0}', space=sflag, size = 0x4, scoped, tag = 'scoped memory for tpu_custom_call.1']
    #allocation9 [shape = 'u8[32768]{0}', space=vmem, size = 0x8000, scoped, tag = 'input window, operand 2, single buffered']
    #allocation10 [shape = 'u8[524288]{0}', space=vmem, size = 0x80000, scoped, tag = 'output window, operand 0']
    %9 = vsyncpa [#allocation5], 0
    %s10 = scalar_lea.sflag [#allocation5], 1
    %11 = vsyncpa %s10, 0
    %12 = vsyncpa [#allocation8], 0
    %13 = vsyncpa [#allocation6], 0
    %s14 = scalar_lea.sflag [#allocation6], 1
    %15 = vsyncpa %s14, 0
    loop: start=0, step=1, limit=6
    $region2: #{tpu_custom_call.1} parent=1 // loop_pre_header
      _
    $region3: #{tpu_custom_call.1} parent=1 // loop_header
      %s17 = sphi 0, %s21
      %p18 = scmp.ge.s32.totalorder %s17, 6
      %s27 = sphi 0, %s29
      %s30 = sphi 0, %s27
      %s31 = sphi 0, %s30
      %s47 = sphi 0, %s31
      %s51 = sphi 0, %s51
      %s53 = sphi 0, %s51
      %s54 = sphi 0, %s53
      %s68 = sphi 0, %s54
      %s72 = sphi 0, %s72
      %s74 = sphi 0, %s72
      %s75 = sphi 0, %s74
      %s89 = sphi 0, %s75
      %s93 = sphi 0, %s93
      %s95 = sphi 0, %s93
      %s96 = sphi 0, %s95
      %s110 = sphi 0, %s96
      %s116 = sphi 0, %s118
      %s119 = sphi 0, %s116
      %s120 = sphi 0, %s119
      %s136 = sphi 0, %s120
    $region4: #{tpu_custom_call.1} parent=1 // loop_header_branch
      %20 = sbr.rel (%p18) target = $region8
    $region5: #{tpu_custom_call.1} parent=1 // loop_body
      %s22 = ssub.s32 %s17, 1
      %s23 = ssub.s32 %s17, 2
      %s24 = sadd.s32 %s17, 1
      %s25 = ssub.s32 %s17, %s24
      %p26 = scmp.eq.s32.totalorder %s25, 0
      %s28 = sadd.s32 %s27, 1
      %s29 = scalar_select %p26, %s27, %s28
      %p32 = pneg %p26
      %p33 = scmp.eq.s32.totalorder %s17, 3
      %p34 = por %p32, %p33
      %p35 = scmp.ne.s32.totalorder %s27, %s30
      %p36 = scmp.eq.s32.totalorder %s17, 0
      %p37 = por %p35, %p36
      %p38 = scmp.ne.s32.totalorder %s27, %s30
      %p39 = scmp.eq.s32.totalorder %s22, 3
      %p40 = por %p38, %p39
      %p41 = scmp.ne.s32.totalorder %s30, %s31
      %p42 = scmp.eq.s32.totalorder %s22, 0
      %p43 = por %p41, %p42
      %p44 = scmp.ne.s32.totalorder %s30, %s31
      %p45 = scmp.eq.s32.totalorder %s23, 3
      %p46 = por %p44, %p45
      %p48 = scmp.ne.s32.totalorder %s31, %s47
      %p49 = scmp.eq.s32.totalorder %s23, 0
      %p50 = por %p48, %p49
      %s52 = sadd.s32 %s51, 1
      %p55 = scmp.eq.s32.totalorder %s17, 3
      %p56 = scmp.ne.s32.totalorder %s51, %s53
      %p57 = scmp.eq.s32.totalorder %s17, 0
      %p58 = por %p56, %p57
      %p59 = scmp.ne.s32.totalorder %s51, %s53
      %p60 = scmp.eq.s32.totalorder %s22, 3
      %p61 = por %p59, %p60
      %p62 = scmp.ne.s32.totalorder %s53, %s54
      %p63 = scmp.eq.s32.totalorder %s22, 0
      %p64 = por %p62, %p63
      %p65 = scmp.ne.s32.totalorder %s53, %s54
      %p66 = scmp.eq.s32.totalorder %s23, 3
      %p67 = por %p65, %p66
      %p69 = scmp.ne.s32.totalorder %s54, %s68
      %p70 = scmp.eq.s32.totalorder %s23, 0
      %p71 = por %p69, %p70
      %s73 = sadd.s32 %s72, 1
      %p76 = scmp.eq.s32.totalorder %s17, 3
      %p77 = scmp.ne.s32.totalorder %s72, %s74
      %p78 = scmp.eq.s32.totalorder %s17, 0
      %p79 = por %p77, %p78
      %p80 = scmp.ne.s32.totalorder %s72, %s74
      %p81 = scmp.eq.s32.totalorder %s22, 3
      %p82 = por %p80, %p81
      %p83 = scmp.ne.s32.totalorder %s74, %s75
      %p84 = scmp.eq.s32.totalorder %s22, 0
      %p85 = por %p83, %p84
      %p86 = scmp.ne.s32.totalorder %s74, %s75
      %p87 = scmp.eq.s32.totalorder %s23, 3
      %p88 = por %p86, %p87
      %p90 = scmp.ne.s32.totalorder %s75, %s89
      %p91 = scmp.eq.s32.totalorder %s23, 0
      %p92 = por %p90, %p91
      %s94 = sadd.s32 %s93, 1
      %p97 = scmp.eq.s32.totalorder %s17, 3
      %p98 = scmp.ne.s32.totalorder %s93, %s95
      %p99 = scmp.eq.s32.totalorder %s17, 0
      %p100 = por %p98, %p99
      %p101 = scmp.ne.s32.totalorder %s93, %s95
      %p102 = scmp.eq.s32.totalorder %s22, 3
      %p103 = por %p101, %p102
      %p104 = scmp.ne.s32.totalorder %s95, %s96
      %p105 = scmp.eq.s32.totalorder %s22, 0
      %p106 = por %p104, %p105
      %p107 = scmp.ne.s32.totalorder %s95, %s96
      %p108 = scmp.eq.s32.totalorder %s23, 3
      %p109 = por %p107, %p108
      %p111 = scmp.ne.s32.totalorder %s96, %s110
      %p112 = scmp.eq.s32.totalorder %s23, 0
      %p113 = por %p111, %p112
      %s114 = ssub.s32 %s17, %s24
      %p115 = scmp.eq.s32.totalorder %s114, 0
      %s117 = sadd.s32 %s116, 1
      %s118 = scalar_select %p115, %s116, %s117
      %p121 = pneg %p115
      %p122 = scmp.eq.s32.totalorder %s17, 3
      %p123 = por %p121, %p122
      %p124 = scmp.ne.s32.totalorder %s116, %s119
      %p125 = scmp.eq.s32.totalorder %s17, 0
      %p126 = por %p124, %p125
      %p127 = scmp.ne.s32.totalorder %s116, %s119
      %p128 = scmp.eq.s32.totalorder %s22, 3
      %p129 = por %p127, %p128
      %p130 = scmp.ne.s32.totalorder %s119, %s120
      %p131 = scmp.eq.s32.totalorder %s22, 0
      %p132 = por %p130, %p131
      %p133 = scmp.ne.s32.totalorder %s119, %s120
      %p134 = scmp.eq.s32.totalorder %s23, 3
      %p135 = por %p133, %p134
      %p137 = scmp.ne.s32.totalorder %s120, %s136
      %p138 = scmp.eq.s32.totalorder %s23, 0
      %p139 = por %p137, %p138
      %p140 = scmp.le.s32.totalorder 1, %s17
      %p141 = scmp.lt.s32.totalorder %s17, 5
      %p142 = pnand %p140, %p141
      %p143 = pneg %p142
      // Predicated region
      $region9: #{tpu_custom_call.1} parent=5 // pred_check
        _
      $region10: #{tpu_custom_call.1} parent=5 // pred_check_branch
        %145 = sbr.rel (%p142) target = $region12
      $region11: #{tpu_custom_call.1} parent=5 // pred_region
        %s146 = ssub.s32 %s17, 1
        // Predicated region
        $region13: #{tpu_custom_call.1} parent=11 // pred_check
          %p147 = pneg %p64
        $region14: #{tpu_custom_call.1} parent=11 // pred_check_branch
          %149 = sbr.rel (%p147) target = $region16
        $region15: #{tpu_custom_call.1} parent=11 // pred_region
          %s151 = ssub.s32 1024, 1024
          %152 = vsyncadd [#allocation8], %s151
          %s153 = sshll.u32 [#allocation7], 4
          %s154 = int_to_ptr.vmem [resolvable:$true] %s153
          %159 = dma.hbm_to_vmem [thread:$0]  %s1, 1024, %s154, [#allocation8], 64, 64, 4
        $region16: #{tpu_custom_call.1} parent=11 // pred_fallthru
          _
        // Predicated region
        $region17: #{tpu_custom_call.1} parent=11 // pred_check
          %p160 = pneg %p85
        $region18: #{tpu_custom_call.1} parent=11 // pred_check_branch
          %162 = sbr.rel (%p160) target = $region20
        $region19: #{tpu_custom_call.1} parent=11 // pred_region
          %s164 = ssub.s32 1024, 1024
          %165 = vsyncadd [#allocation8], %s164
          %s166 = sshll.u32 [#allocation9], 4
          %s167 = int_to_ptr.vmem [resolvable:$true] %s166
          %172 = dma.hbm_to_vmem [thread:$0]  %s2, 1024, %s167, [#allocation8], 64, 64, 4
        $region20: #{tpu_custom_call.1} parent=11 // pred_fallthru
          _
        // Predicated region
        $region21: #{tpu_custom_call.1} parent=11 // pred_check
          %p173 = pneg %p106
        $region22: #{tpu_custom_call.1} parent=11 // pred_check_branch
          %175 = sbr.rel (%p173) target = $region24
        $region23: #{tpu_custom_call.1} parent=11 // pred_region
          _
        $region24: #{tpu_custom_call.1} parent=11 // pred_fallthru
          _
      $region12: #{tpu_custom_call.1} parent=5 // pred_fallthru
        _
      %p176 = scmp.lt.s32.totalorder %s17, 4
      // Predicated region
      $region25: #{tpu_custom_call.1} parent=5 // pred_check
        %p177 = pneg %p176
      $region26: #{tpu_custom_call.1} parent=5 // pred_check_branch
        %179 = sbr.rel (%p177) target = $region28
      $region27: #{tpu_custom_call.1} parent=5 // pred_region
        // Predicated region
        $region29: #{tpu_custom_call.1} parent=27 // pred_check
          %p180 = pneg %p37
        $region30: #{tpu_custom_call.1} parent=27 // pred_check_branch
          %182 = sbr.rel (%p180) target = $region32
        $region31: #{tpu_custom_call.1} parent=27 // pred_region
          #allocation12 [shape = 'u32[6]{0}', space=smem, size = 0x18, scoped, tag = 'DMA stride descriptor']
          %s183 = sand.u32 %s27, 1
          %s184 = scalar_lea.sflag [#allocation5], %s183
          %s185 = sand.u32 %s27, 1
          %s186 = smul.addr %s185, 512
          %s187 = scalar_lea.vmem [#allocation4], %s186
          %s188 = smul.u32 16, %s17
          %s190 = ssub.s32 8192, 8192
          %191 = vsyncadd %s184, %s190
          %s192 = smul.addr %s188, 128
          %s193 = scalar_lea.hbm %s0, %s192
          %s195 = sshll.u32 1, 14
          %s196 = sxor.u32 4294967295, %s195
          %s198 = sld [smem:[#allocation0]]
          %s199 = sadd.s32 2, %s198
          %s201 = sshll.u32 7, 26
          %s202 = sxor.u32 4294967295, %s201
          %s203 = sand.u32 0, %s202
          %s204 = sshll.u32 %s199, 26
          %s205 = sor.u32 %s203, %s204
          %s206 = sshll.u32 %s187, 4
          %s207 = int_to_ptr.vmem [resolvable:$true] %s206
          %213 = sst [smem:[#allocation12]] 8192
          %s214 = scalar_lea.smem [#allocation12], 1
          %215 = sst [smem:[%s214]] 2048
          %s216 = scalar_lea.smem [#allocation12], 2
          %217 = sst [smem:[%s216]] 16
          %s218 = scalar_lea.smem [#allocation12], 3
          %219 = sst [smem:[%s218]] 128
          %s220 = scalar_lea.smem [#allocation12], 4
          %221 = sst [smem:[%s220]] 128
          %s222 = scalar_lea.smem [#allocation12], 5
          %223 = sst [smem:[%s222]] 8
          %225 = dma.general %s193, 8192, %s207, %s184, [#allocation11], [#allocation12], %s205, 0
        $region32: #{tpu_custom_call.1} parent=27 // pred_fallthru
          _
      $region28: #{tpu_custom_call.1} parent=5 // pred_fallthru
        _
      %p226 = scmp.le.s32.totalorder 1, %s17
      %p227 = scmp.lt.s32.totalorder %s17, 5
      %p228 = pnand %p226, %p227
      %p229 = pneg %p228
      // Predicated region
      $region33: #{tpu_custom_call.1} parent=5 // pred_check
        _
      $region34: #{tpu_custom_call.1} parent=5 // pred_check_branch
        %231 = sbr.rel (%p228) target = $region36
      $region35: #{tpu_custom_call.1} parent=5 // pred_region
        %s232 = ssub.s32 %s17, 1
        %s233 = sand.u32 %s30, 1
        %s234 = scalar_lea.sflag [#allocation5], %s233
        %s235 = sand.u32 %s30, 1
        %s236 = smul.addr %s235, 512
        %s237 = scalar_lea.vmem [#allocation4], %s236
        // Predicated region
        $region37: #{tpu_custom_call.1} parent=35 // pred_check
          %p238 = pneg %p43
        $region38: #{tpu_custom_call.1} parent=35 // pred_check_branch
          %240 = sbr.rel (%p238) target = $region40
        $region39: #{tpu_custom_call.1} parent=35 // pred_region
          %241 = dma.done %s234, 8192
        $region40: #{tpu_custom_call.1} parent=35 // pred_fallthru
          _
        // Predicated region
        $region41: #{tpu_custom_call.1} parent=35 // pred_check
          %p242 = pneg %p64
        $region42: #{tpu_custom_call.1} parent=35 // pred_check_branch
          %244 = sbr.rel (%p242) target = $region44
        $region43: #{tpu_custom_call.1} parent=35 // pred_region
          %245 = dma.done [#allocation8], 1024
        $region44: #{tpu_custom_call.1} parent=35 // pred_fallthru
          _
        // Predicated region
        $region45: #{tpu_custom_call.1} parent=35 // pred_check
          %p246 = pneg %p85
        $region46: #{tpu_custom_call.1} parent=35 // pred_check_branch
          %248 = sbr.rel (%p246) target = $region48
        $region47: #{tpu_custom_call.1} parent=35 // pred_region
          %249 = dma.done [#allocation8], 1024
        $region48: #{tpu_custom_call.1} parent=35 // pred_fallthru
          _
        %s250 = sand.u32 %s30, 1
        %s251 = scalar_lea.sflag [#allocation5], %s250
        %s252 = sand.u32 %s30, 1
        %s253 = smul.addr %s252, 512
        %s254 = scalar_lea.vmem [#allocation4], %s253
        %p255 = pneg %p43
        %p256 = pneg %p40
        %p257 = pneg %p64
        %p258 = pneg %p61
        %p259 = pneg %p85
        %p260 = pneg %p82
        %p261 = pneg %p106
        %p262 = pneg %p103
        %p263 = pneg %p132
        %p264 = pneg %p129
        %s265 = sand.u32 %s119, 1
        %s266 = scalar_lea.sflag [#allocation6], %s265
        %s267 = sand.u32 %s119, 1
        %s268 = smul.addr %s267, 512
        %s269 = scalar_lea.vmem [#allocation10], %s268
        %s270 = smul.u32 16, %s22
        %s271 = smul.u32 16, %s22
        %v273 = vld [vmem:[%s237] sm:$0xff]
        %v274 = vld [vmem:[%s237 + $0x8] sm:$0xff]
        %v275 = vld [vmem:[%s237 + $0x10] sm:$0xff]
        %v276 = vld [vmem:[%s237 + $0x18] sm:$0xff]
        %v277 = vld [vmem:[%s237 + $0x20] sm:$0xff]
        %v278 = vld [vmem:[%s237 + $0x28] sm:$0xff]
        %v279 = vld [vmem:[%s237 + $0x30] sm:$0xff]
        %v280 = vld [vmem:[%s237 + $0x38] sm:$0xff]
        %v281 = vld [vmem:[%s237 + $0x40] sm:$0xff]
        %v282 = vld [vmem:[%s237 + $0x48] sm:$0xff]
        %v283 = vld [vmem:[%s237 + $0x50] sm:$0xff]
        %v284 = vld [vmem:[%s237 + $0x58] sm:$0xff]
        %v285 = vld [vmem:[%s237 + $0x60] sm:$0xff]
        %v286 = vld [vmem:[%s237 + $0x68] sm:$0xff]
        %v287 = vld [vmem:[%s237 + $0x70] sm:$0xff]
        %v288 = vld [vmem:[%s237 + $0x78] sm:$0xff]
        %v289 = vld [vmem:[%s237 + $0x80] sm:$0xff]
        %v290 = vld [vmem:[%s237 + $0x88] sm:$0xff]
        %v291 = vld [vmem:[%s237 + $0x90] sm:$0xff]
        %v292 = vld [vmem:[%s237 + $0x98] sm:$0xff]
        %v293 = vld [vmem:[%s237 + $0xa0] sm:$0xff]
        %v294 = vld [vmem:[%s237 + $0xa8] sm:$0xff]
        %v295 = vld [vmem:[%s237 + $0xb0] sm:$0xff]
        %v296 = vld [vmem:[%s237 + $0xb8] sm:$0xff]
        %v297 = vld [vmem:[%s237 + $0xc0] sm:$0xff]
        %v298 = vld [vmem:[%s237 + $0xc8] sm:$0xff]
        %v299 = vld [vmem:[%s237 + $0xd0] sm:$0xff]
        %v300 = vld [vmem:[%s237 + $0xd8] sm:$0xff]
        %v301 = vld [vmem:[%s237 + $0xe0] sm:$0xff]
        %v302 = vld [vmem:[%s237 + $0xe8] sm:$0xff]
        %v303 = vld [vmem:[%s237 + $0xf0] sm:$0xff]
        %v304 = vld [vmem:[%s237 + $0xf8] sm:$0xff]
        %v305 = vld [vmem:[%s237 + $0x100] sm:$0xff]
        %v306 = vld [vmem:[%s237 + $0x108] sm:$0xff]
        %v307 = vld [vmem:[%s237 + $0x110] sm:$0xff]
        %v308 = vld [vmem:[%s237 + $0x118] sm:$0xff]
        %v309 = vld [vmem:[%s237 + $0x120] sm:$0xff]
        %v310 = vld [vmem:[%s237 + $0x128] sm:$0xff]
        %v311 = vld [vmem:[%s237 + $0x130] sm:$0xff]
        %v312 = vld [vmem:[%s237 + $0x138] sm:$0xff]
        %v313 = vld [vmem:[%s237 + $0x140] sm:$0xff]
        %v314 = vld [vmem:[%s237 + $0x148] sm:$0xff]
        %v315 = vld [vmem:[%s237 + $0x150] sm:$0xff]
        %v316 = vld [vmem:[%s237 + $0x158] sm:$0xff]
        %v317 = vld [vmem:[%s237 + $0x160] sm:$0xff]
        %v318 = vld [vmem:[%s237 + $0x168] sm:$0xff]
        %v319 = vld [vmem:[%s237 + $0x170] sm:$0xff]
        %v320 = vld [vmem:[%s237 + $0x178] sm:$0xff]
        %v321 = vld [vmem:[%s237 + $0x180] sm:$0xff]
        %v322 = vld [vmem:[%s237 + $0x188] sm:$0xff]
        %v323 = vld [vmem:[%s237 + $0x190] sm:$0xff]
        %v324 = vld [vmem:[%s237 + $0x198] sm:$0xff]
        %v325 = vld [vmem:[%s237 + $0x1a0] sm:$0xff]
        %v326 = vld [vmem:[%s237 + $0x1a8] sm:$0xff]
        %v327 = vld [vmem:[%s237 + $0x1b0] sm:$0xff]
        %v328 = vld [vmem:[%s237 + $0x1b8] sm:$0xff]
        %v329 = vld [vmem:[%s237 + $0x1c0] sm:$0xff]
        %v330 = vld [vmem:[%s237 + $0x1c8] sm:$0xff]
        %v331 = vld [vmem:[%s237 + $0x1d0] sm:$0xff]
        %v332 = vld [vmem:[%s237 + $0x1d8] sm:$0xff]
        %v333 = vld [vmem:[%s237 + $0x1e0] sm:$0xff]
        %v334 = vld [vmem:[%s237 + $0x1e8] sm:$0xff]
        %v335 = vld [vmem:[%s237 + $0x1f0] sm:$0xff]
        %v336 = vld [vmem:[%s237 + $0x1f8] sm:$0xff]
        %v337 = vpack.c.bf16 %v274, %v273
        %v338 = vpack.c.bf16 %v276, %v275
        %v339 = vpack.c.bf16 %v278, %v277
        %v340 = vpack.c.bf16 %v280, %v279
        %v341 = vpack.c.bf16 %v282, %v281
        %v342 = vpack.c.bf16 %v284, %v283
        %v343 = vpack.c.bf16 %v286, %v285
        %v344 = vpack.c.bf16 %v288, %v287
        %v345 = vpack.c.bf16 %v290, %v289
        %v346 = vpack.c.bf16 %v292, %v291
        %v347 = vpack.c.bf16 %v294, %v293
        %v348 = vpack.c.bf16 %v296, %v295
        %v349 = vpack.c.bf16 %v298, %v297
        %v350 = vpack.c.bf16 %v300, %v299
        %v351 = vpack.c.bf16 %v302, %v301
        %v352 = vpack.c.bf16 %v304, %v303
        %v353 = vpack.c.bf16 %v306, %v305
        %v354 = vpack.c.bf16 %v308, %v307
        %v355 = vpack.c.bf16 %v310, %v309
        %v356 = vpack.c.bf16 %v312, %v311
        %v357 = vpack.c.bf16 %v314, %v313
        %v358 = vpack.c.bf16 %v316, %v315
        %v359 = vpack.c.bf16 %v318, %v317
        %v360 = vpack.c.bf16 %v320, %v319
        %v361 = vpack.c.bf16 %v322, %v321
        %v362 = vpack.c.bf16 %v324, %v323
        %v363 = vpack.c.bf16 %v326, %v325
        %v364 = vpack.c.bf16 %v328, %v327
        %v365 = vpack.c.bf16 %v330, %v329
        %v366 = vpack.c.bf16 %v332, %v331
        %v367 = vpack.c.bf16 %v334, %v333
        %v368 = vpack.c.bf16 %v336, %v335
        %v369 = vld [vmem:[#allocation7] sm:$0xf]
        %v370 = vld [vmem:[#allocation7 + $0x4] sm:$0xf]
        %v371 = vld [vmem:[#allocation7 + $0x8] sm:$0xf]
        %v372 = vld [vmem:[#allocation7 + $0xc] sm:$0xf]
        %v373 = vld [vmem:[#allocation7 + $0x10] sm:$0xf]
        %v374 = vld [vmem:[#allocation7 + $0x14] sm:$0xf]
        %v375 = vld [vmem:[#allocation7 + $0x18] sm:$0xf]
        %v376 = vld [vmem:[#allocation7 + $0x1c] sm:$0xf]
        %v377 = vld [vmem:[#allocation7 + $0x20] sm:$0xf]
        %v378 = vld [vmem:[#allocation7 + $0x24] sm:$0xf]
        %v379 = vld [vmem:[#allocation7 + $0x28] sm:$0xf]
        %v380 = vld [vmem:[#allocation7 + $0x2c] sm:$0xf]
        %v381 = vld [vmem:[#allocation7 + $0x30] sm:$0xf]
        %v382 = vld [vmem:[#allocation7 + $0x34] sm:$0xf]
        %v383 = vld [vmem:[#allocation7 + $0x38] sm:$0xf]
        %v384 = vld [vmem:[#allocation7 + $0x3c] sm:$0xf]
        %v401 = vunpack.c.l.b16 %v369
        %v402 = vunpack.c.l.b16 %v370
        %v403 = vunpack.c.l.b16 %v371
        %v404 = vunpack.c.l.b16 %v372
        %v405 = vunpack.c.l.b16 %v373
        %v406 = vunpack.c.l.b16 %v374
        %v407 = vunpack.c.l.b16 %v375
        %v408 = vunpack.c.l.b16 %v376
        %v409 = vunpack.c.l.b16 %v377
        %v410 = vunpack.c.l.b16 %v378
        %v411 = vunpack.c.l.b16 %v379
        %v412 = vunpack.c.l.b16 %v380
        %v413 = vunpack.c.l.b16 %v381
        %v414 = vunpack.c.l.b16 %v382
        %v415 = vunpack.c.l.b16 %v383
        %v416 = vunpack.c.l.b16 %v384
        %v417 = vpack.c.b16 %v402, %v401
        %v418 = vpack.c.b16 %v404, %v403
        %v419 = vpack.c.b16 %v406, %v405
        %v420 = vpack.c.b16 %v408, %v407
        %v421 = vpack.c.b16 %v410, %v409
        %v422 = vpack.c.b16 %v412, %v411
        %v423 = vpack.c.b16 %v414, %v413
        %v424 = vpack.c.b16 %v416, %v415
        %433 = vmatprep.subr.bf16.mxu0 0
        %434 = vmatpush1.bf16.msra.mxu0 %v417
        %435 = vmatprep.subr.bf16.mxu0 0
        %436 = vmatpush1.bf16.msra.mxu0 %v418
        %437 = vmatprep.subr.bf16.mxu0 0
        %438 = vmatpush1.bf16.msra.mxu0 %v419
        %439 = vmatprep.subr.bf16.mxu0 0
        %440 = vmatpush1.bf16.msra.mxu0 %v420
        %441 = vmatprep.subr.bf16.mxu0 0
        %442 = vmatpush1.bf16.msra.mxu0 %v421
        %443 = vmatprep.subr.bf16.mxu0 0
        %444 = vmatpush1.bf16.msra.mxu0 %v422
        %445 = vmatprep.subr.bf16.mxu0 0
        %446 = vmatpush1.bf16.msra.mxu0 %v423
        %447 = vmatprep.subr.bf16.mxu0 0
        %448 = vmatpush1.bf16.msra.mxu0 %v424
        %449 = vmatprep.subr.bf16.mxu0 0
        %450 = vmatpush1.bf16.msra.mxu0 0
        %451 = vmatprep.subr.bf16.mxu0 0
        %452 = vmatpush1.bf16.msra.mxu0 0
        %453 = vmatprep.subr.bf16.mxu0 0
        %454 = vmatpush1.bf16.msra.mxu0 0
        %455 = vmatprep.subr.bf16.mxu0 0
        %456 = vmatpush1.bf16.msra.mxu0 0
        %457 = vmatprep.subr.bf16.mxu0 0
        %458 = vmatpush1.bf16.msra.mxu0 0
        %459 = vmatprep.subr.bf16.mxu0 0
        %460 = vmatpush1.bf16.msra.mxu0 0
        %461 = vmatprep.subr.bf16.mxu0 0
        %462 = vmatpush1.bf16.msra.mxu0 0
        %463 = vmatprep.subr.bf16.mxu0 0
        %464 = vmatpush1.bf16.msra.mxu0 0
        %465 = vmatprep.mubr.bf16.mxu0 0
        %466 = vmatmul.mubr.bf16.gmra.mrb[0].mxu0 %v337
        %v467 = vpop.f32.mrb[0].mxu0
        %v468 = vadd.f32 0.0, %v467
        %v469 = vpop.f32.mrb[0].mxu0
        %v470 = vpop.f32.mrb[0].mxu0
        %v471 = vadd.f32 0.0, %v470
        %v472 = vpop.f32.mrb[0].mxu0
        %473 = vmatprep.mubr.bf16.mxu0 0
        %474 = vmatmul.mubr.bf16.gmra.mrb[0].mxu0 %v338
        %v475 = vpop.f32.mrb[0].mxu0
        %v476 = vadd.f32 0.0, %v475
        %v477 = vpop.f32.mrb[0].mxu0
        %v478 = vpop.f32.mrb[0].mxu0
        %v479 = vadd.f32 0.0, %v478
        %v480 = vpop.f32.mrb[0].mxu0
        %481 = vmatprep.mubr.bf16.mxu0 0
        %482 = vmatmul.mubr.bf16.gmra.mrb[0].mxu0 %v339
        %v483 = vpop.f32.mrb[0].mxu0
        %v484 = vadd.f32 0.0, %v483
        %v485 = vpop.f32.mrb[0].mxu0
        %v486 = vpop.f32.mrb[0].mxu0
        %v487 = vadd.f32 0.0, %v486
        %v488 = vpop.f32.mrb[0].mxu0
        %489 = vmatprep.mubr.bf16.mxu0 0
        %490 = vmatmul.mubr.bf16.gmra.mrb[0].mxu0 %v340
        %v491 = vpop.f32.mrb[0].mxu0
        %v492 = vadd.f32 0.0, %v491
        %v493 = vpop.f32.mrb[0].mxu0
        %v494 = vpop.f32.mrb[0].mxu0
        %v495 = vadd.f32 0.0, %v494
        %v496 = vpop.f32.mrb[0].mxu0
        %497 = vmatprep.mubr.bf16.mxu0 0
        %498 = vmatmul.mubr.bf16.gmra.mrb[0].mxu0 %v341
        %v499 = vpop.f32.mrb[0].mxu0
        %v500 = vadd.f32 0.0, %v499
        %v501 = vpop.f32.mrb[0].mxu0
        %v502 = vpop.f32.mrb[0].mxu0
        %v503 = vadd.f32 0.0, %v502
        %v504 = vpop.f32.mrb[0].mxu0
        %505 = vmatprep.mubr.bf16.mxu0 0
        %506 = vmatmul.mubr.bf16.gmra.mrb[0].mxu0 %v342
        %v507 = vpop.f32.mrb[0].mxu0
        %v508 = vadd.f32 0.0, %v507
        %v509 = vpop.f32.mrb[0].mxu0
        %v510 = vpop.f32.mrb[0].mxu0
        %v511 = vadd.f32 0.0, %v510
        %v512 = vpop.f32.mrb[0].mxu0
        %513 = vmatprep.mubr.bf16.mxu0 0
        %514 = vmatmul.mubr.bf16.gmra.mrb[0].mxu0 %v343
        %v515 = vpop.f32.mrb[0].mxu0
        %v516 = vadd.f32 0.0, %v515
        %v517 = vpop.f32.mrb[0].mxu0
        %v518 = vpop.f32.mrb[0].mxu0
        %v519 = vadd.f32 0.0, %v518
        %v520 = vpop.f32.mrb[0].mxu0
        %521 = vmatprep.mubr.bf16.mxu0 0
        %522 = vmatmul.mubr.bf16.gmra.mrb[0].mxu0 %v344
        %v523 = vpop.f32.mrb[0].mxu0
        %v524 = vadd.f32 0.0, %v523
        %v525 = vpop.f32.mrb[0].mxu0
        %v526 = vpop.f32.mrb[0].mxu0
        %v527 = vadd.f32 0.0, %v526
        %v528 = vpop.f32.mrb[0].mxu0
        %529 = vmatprep.mubr.bf16.mxu0 0
        %530 = vmatmul.mubr.bf16.gmra.mrb[0].mxu0 %v345
        %v531 = vpop.f32.mrb[0].mxu0
        %v532 = vadd.f32 0.0, %v531
        %v533 = vpop.f32.mrb[0].mxu0
        %v534 = vpop.f32.mrb[0].mxu0
        %v535 = vadd.f32 0.0, %v534
        %v536 = vpop.f32.mrb[0].mxu0
        %537 = vmatprep.mubr.bf16.mxu0 0
        %538 = vmatmul.mubr.bf16.gmra.mrb[0].mxu0 %v346
        %v539 = vpop.f32.mrb[0].mxu0
        %v540 = vadd.f32 0.0, %v539
        %v541 = vpop.f32.mrb[0].mxu0
        %v542 = vpop.f32.mrb[0].mxu0
        %v543 = vadd.f32 0.0, %v542
        %v544 = vpop.f32.mrb[0].mxu0
        %545 = vmatprep.mubr.bf16.mxu0 0
        %546 = vmatmul.mubr.bf16.gmra.mrb[0].mxu0 %v347
        %v547 = vpop.f32.mrb[0].mxu0
        %v548 = vadd.f32 0.0, %v547
        %v549 = vpop.f32.mrb[0].mxu0
        %v550 = vpop.f32.mrb[0].mxu0
        %v551 = vadd.f32 0.0, %v550
        %v552 = vpop.f32.mrb[0].mxu0
        %553 = vmatprep.mubr.bf16.mxu0 0
        %554 = vmatmul.mubr.bf16.gmra.mrb[0].mxu0 %v348
        %v555 = vpop.f32.mrb[0].mxu0
        %v556 = vadd.f32 0.0, %v555
        %v557 = vpop.f32.mrb[0].mxu0
        %v558 = vpop.f32.mrb[0].mxu0
        %v559 = vadd.f32 0.0, %v558
        %v560 = vpop.f32.mrb[0].mxu0
        %561 = vmatprep.mubr.bf16.mxu0 0
        %562 = vmatmul.mubr.bf16.gmra.mrb[0].mxu0 %v349
        %v563 = vpop.f32.mrb[0].mxu0
        %v564 = vadd.f32 0.0, %v563
        %v565 = vpop.f32.mrb[0].mxu0
        %v566 = vpop.f32.mrb[0].mxu0
        %v567 = vadd.f32 0.0, %v566
        %v568 = vpop.f32.mrb[0].mxu0
        %569 = vmatprep.mubr.bf16.mxu0 0
        %570 = vmatmul.mubr.bf16.gmra.mrb[0].mxu0 %v350
        %v571 = vpop.f32.mrb[0].mxu0
        %v572 = vadd.f32 0.0, %v571
        %v573 = vpop.f32.mrb[0].mxu0
        %v574 = vpop.f32.mrb[0].mxu0
        %v575 = vadd.f32 0.0, %v574
        %v576 = vpop.f32.mrb[0].mxu0
        %577 = vmatprep.mubr.bf16.mxu0 0
        %578 = vmatmul.mubr.bf16.gmra.mrb[0].mxu0 %v351
        %v579 = vpop.f32.mrb[0].mxu0
        %v580 = vadd.f32 0.0, %v579
        %v581 = vpop.f32.mrb[0].mxu0
        %v582 = vpop.f32.mrb[0].mxu0
        %v583 = vadd.f32 0.0, %v582
        %v584 = vpop.f32.mrb[0].mxu0
        %585 = vmatprep.mubr.bf16.mxu0 0
        %586 = vmatmul.mubr.bf16.gmra.mrb[0].mxu0 %v352
        %v587 = vpop.f32.mrb[0].mxu0
        %v588 = vadd.f32 0.0, %v587
        %v589 = vpop.f32.mrb[0].mxu0
        %v590 = vpop.f32.mrb[0].mxu0
        %v591 = vadd.f32 0.0, %v590
        %v592 = vpop.f32.mrb[0].mxu0
        %593 = vmatprep.mubr.bf16.mxu0 0
        %594 = vmatmul.mubr.bf16.gmra.mrb[0].mxu0 %v353
        %v595 = vpop.f32.mrb[0].mxu0
        %v596 = vadd.f32 0.0, %v595
        %v597 = vpop.f32.mrb[0].mxu0
        %v598 = vpop.f32.mrb[0].mxu0
        %v599 = vadd.f32 0.0, %v598
        %v600 = vpop.f32.mrb[0].mxu0
        %601 = vmatprep.mubr.bf16.mxu0 0
        %602 = vmatmul.mubr.bf16.gmra.mrb[0].mxu0 %v354
        %v603 = vpop.f32.mrb[0].mxu0
        %v604 = vadd.f32 0.0, %v603
        %v605 = vpop.f32.mrb[0].mxu0
        %v606 = vpop.f32.mrb[0].mxu0
        %v607 = vadd.f32 0.0, %v606
        %v608 = vpop.f32.mrb[0].mxu0
        %609 = vmatprep.mubr.bf16.mxu0 0
        %610 = vmatmul.mubr.bf16.gmra.mrb[0].mxu0 %v355
        %v611 = vpop.f32.mrb[0].mxu0
        %v612 = vadd.f32 0.0, %v611
        %v613 = vpop.f32.mrb[0].mxu0
        %v614 = vpop.f32.mrb[0].mxu0
        %v615 = vadd.f32 0.0, %v614
        %v616 = vpop.f32.mrb[0].mxu0
        %617 = vmatprep.mubr.bf16.mxu0 0
        %618 = vmatmul.mubr.bf16.gmra.mrb[0].mxu0 %v356
        %v619 = vpop.f32.mrb[0].mxu0
        %v620 = vadd.f32 0.0, %v619
        %v621 = vpop.f32.mrb[0].mxu0
        %v622 = vpop.f32.mrb[0].mxu0
        %v623 = vadd.f32 0.0, %v622
        %v624 = vpop.f32.mrb[0].mxu0
        %625 = vmatprep.mubr.bf16.mxu0 0
        %626 = vmatmul.mubr.bf16.gmra.mrb[0].mxu0 %v357
        %v627 = vpop.f32.mrb[0].mxu0
        %v628 = vadd.f32 0.0, %v627
        %v629 = vpop.f32.mrb[0].mxu0
        %v630 = vpop.f32.mrb[0].mxu0
        %v631 = vadd.f32 0.0, %v630
        %v632 = vpop.f32.mrb[0].mxu0
        %633 = vmatprep.mubr.bf16.mxu0 0
        %634 = vmatmul.mubr.bf16.gmra.mrb[0].mxu0 %v358
        %v635 = vpop.f32.mrb[0].mxu0
        %v636 = vadd.f32 0.0, %v635
        %v637 = vpop.f32.mrb[0].mxu0
        %v638 = vpop.f32.mrb[0].mxu0
        %v639 = vadd.f32 0.0, %v638
        %v640 = vpop.f32.mrb[0].mxu0
        %641 = vmatprep.mubr.bf16.mxu0 0
        %642 = vmatmul.mubr.bf16.gmra.mrb[0].mxu0 %v359
        %v643 = vpop.f32.mrb[0].mxu0
        %v644 = vadd.f32 0.0, %v643
        %v645 = vpop.f32.mrb[0].mxu0
        %v646 = vpop.f32.mrb[0].mxu0
        %v647 = vadd.f32 0.0, %v646
        %v648 = vpop.f32.mrb[0].mxu0
        %649 = vmatprep.mubr.bf16.mxu0 0
        %650 = vmatmul.mubr.bf16.gmra.mrb[0].mxu0 %v360
        %v651 = vpop.f32.mrb[0].mxu0
        %v652 = vadd.f32 0.0, %v651
        %v653 = vpop.f32.mrb[0].mxu0
        %v654 = vpop.f32.mrb[0].mxu0
        %v655 = vadd.f32 0.0, %v654
        %v656 = vpop.f32.mrb[0].mxu0
        %657 = vmatprep.mubr.bf16.mxu0 0
        %658 = vmatmul.mubr.bf16.gmra.mrb[0].mxu0 %v361
        %v659 = vpop.f32.mrb[0].mxu0
        %v660 = vadd.f32 0.0, %v659
        %v661 = vpop.f32.mrb[0].mxu0
        %v662 = vpop.f32.mrb[0].mxu0
        %v663 = vadd.f32 0.0, %v662
        %v664 = vpop.f32.mrb[0].mxu0
        %665 = vmatprep.mubr.bf16.mxu0 0
        %666 = vmatmul.mubr.bf16.gmra.mrb[0].mxu0 %v362
        %v667 = vpop.f32.mrb[0].mxu0
        %v668 = vadd.f32 0.0, %v667
        %v669 = vpop.f32.mrb[0].mxu0
        %v670 = vpop.f32.mrb[0].mxu0
        %v671 = vadd.f32 0.0, %v670
        %v672 = vpop.f32.mrb[0].mxu0
        %673 = vmatprep.mubr.bf16.mxu0 0
        %674 = vmatmul.mubr.bf16.gmra.mrb[0].mxu0 %v363
        %v675 = vpop.f32.mrb[0].mxu0
        %v676 = vadd.f32 0.0, %v675
        %v677 = vpop.f32.mrb[0].mxu0
        %v678 = vpop.f32.mrb[0].mxu0
        %v679 = vadd.f32 0.0, %v678
        %v680 = vpop.f32.mrb[0].mxu0
        %681 = vmatprep.mubr.bf16.mxu0 0
        %682 = vmatmul.mubr.bf16.gmra.mrb[0].mxu0 %v364
        %v683 = vpop.f32.mrb[0].mxu0
        %v684 = vadd.f32 0.0, %v683
        %v685 = vpop.f32.mrb[0].mxu0
        %v686 = vpop.f32.mrb[0].mxu0
        %v687 = vadd.f32 0.0, %v686
        %v688 = vpop.f32.mrb[0].mxu0
        %689 = vmatprep.mubr.bf16.mxu0 0
        %690 = vmatmul.mubr.bf16.gmra.mrb[0].mxu0 %v365
        %v691 = vpop.f32.mrb[0].mxu0
        %v692 = vadd.f32 0.0, %v691
        %v693 = vpop.f32.mrb[0].mxu0
        %v694 = vpop.f32.mrb[0].mxu0
        %v695 = vadd.f32 0.0, %v694
        %v696 = vpop.f32.mrb[0].mxu0
        %697 = vmatprep.mubr.bf16.mxu0 0
        %698 = vmatmul.mubr.bf16.gmra.mrb[0].mxu0 %v366
        %v699 = vpop.f32.mrb[0].mxu0
        %v700 = vadd.f32 0.0, %v699
        %v701 = vpop.f32.mrb[0].mxu0
        %v702 = vpop.f32.mrb[0].mxu0
        %v703 = vadd.f32 0.0, %v702
        %v704 = vpop.f32.mrb[0].mxu0
        %705 = vmatprep.mubr.bf16.mxu0 0
        %706 = vmatmul.mubr.bf16.gmra.mrb[0].mxu0 %v367
        %v707 = vpop.f32.mrb[0].mxu0
        %v708 = vadd.f32 0.0, %v707
        %v709 = vpop.f32.mrb[0].mxu0
        %v710 = vpop.f32.mrb[0].mxu0
        %v711 = vadd.f32 0.0, %v710
        %v712 = vpop.f32.mrb[0].mxu0
        %713 = vmatprep.mubr.bf16.mxu0 0
        %714 = vmatmul.mubr.bf16.gmra.mrb[0].mxu0 %v368
        %v715 = vpop.f32.mrb[0].mxu0
        %v716 = vadd.f32 0.0, %v715
        %v717 = vpop.f32.mrb[0].mxu0
        %v718 = vpop.f32.mrb[0].mxu0
        %v719 = vadd.f32 0.0, %v718
        %v720 = vpop.f32.mrb[0].mxu0
        %721 = vdwg.mxu0
        %722 = vst [vmem:[#allocation2] sm:$0xff] %v468
        %723 = vst [vmem:[#allocation2 + $0x8] sm:$0xff] %v471
        %724 = vst [vmem:[#allocation2 + $0x10] sm:$0xff] %v476
        %725 = vst [vmem:[#allocation2 + $0x18] sm:$0xff] %v479
        %726 = vst [vmem:[#allocation2 + $0x20] sm:$0xff] %v484
        %727 = vst [vmem:[#allocation2 + $0x28] sm:$0xff] %v487
        %728 = vst [vmem:[#allocation2 + $0x30] sm:$0xff] %v492
        %729 = vst [vmem:[#allocation2 + $0x38] sm:$0xff] %v495
        %730 = vst [vmem:[#allocation2 + $0x40] sm:$0xff] %v500
        %731 = vst [vmem:[#allocation2 + $0x48] sm:$0xff] %v503
        %732 = vst [vmem:[#allocation2 + $0x50] sm:$0xff] %v508
        %733 = vst [vmem:[#allocation2 + $0x58] sm:$0xff] %v511
        %734 = vst [vmem:[#allocation2 + $0x60] sm:$0xff] %v516
        %735 = vst [vmem:[#allocation2 + $0x68] sm:$0xff] %v519
        %736 = vst [vmem:[#allocation2 + $0x70] sm:$0xff] %v524
        %737 = vst [vmem:[#allocation2 + $0x78] sm:$0xff] %v527
        %738 = vst [vmem:[#allocation2 + $0x80] sm:$0xff] %v532
        %739 = vst [vmem:[#allocation2 + $0x88] sm:$0xff] %v535
        %740 = vst [vmem:[#allocation2 + $0x90] sm:$0xff] %v540
        %741 = vst [vmem:[#allocation2 + $0x98] sm:$0xff] %v543
        %742 = vst [vmem:[#allocation2 + $0xa0] sm:$0xff] %v548
        %743 = vst [vmem:[#allocation2 + $0xa8] sm:$0xff] %v551
        %744 = vst [vmem:[#allocation2 + $0xb0] sm:$0xff] %v556
        %745 = vst [vmem:[#allocation2 + $0xb8] sm:$0xff] %v559
        %746 = vst [vmem:[#allocation2 + $0xc0] sm:$0xff] %v564
        %747 = vst [vmem:[#allocation2 + $0xc8] sm:$0xff] %v567
        %748 = vst [vmem:[#allocation2 + $0xd0] sm:$0xff] %v572
        %749 = vst [vmem:[#allocation2 + $0xd8] sm:$0xff] %v575
        %750 = vst [vmem:[#allocation2 + $0xe0] sm:$0xff] %v580
        %751 = vst [vmem:[#allocation2 + $0xe8] sm:$0xff] %v583
        %752 = vst [vmem:[#allocation2 + $0xf0] sm:$0xff] %v588
        %753 = vst [vmem:[#allocation2 + $0xf8] sm:$0xff] %v591
        %754 = vst [vmem:[#allocation2 + $0x100] sm:$0xff] %v596
        %755 = vst [vmem:[#allocation2 + $0x108] sm:$0xff] %v599
        %756 = vst [vmem:[#allocation2 + $0x110] sm:$0xff] %v604
        %757 = vst [vmem:[#allocation2 + $0x118] sm:$0xff] %v607
        %758 = vst [vmem:[#allocation2 + $0x120] sm:$0xff] %v612
        %759 = vst [vmem:[#allocation2 + $0x128] sm:$0xff] %v615
        %760 = vst [vmem:[#allocation2 + $0x130] sm:$0xff] %v620
        %761 = vst [vmem:[#allocation2 + $0x138] sm:$0xff] %v623
        %762 = vst [vmem:[#allocation2 + $0x140] sm:$0xff] %v628
        %763 = vst [vmem:[#allocation2 + $0x148] sm:$0xff] %v631
        %764 = vst [vmem:[#allocation2 + $0x150] sm:$0xff] %v636
        %765 = vst [vmem:[#allocation2 + $0x158] sm:$0xff] %v639
        %766 = vst [vmem:[#allocation2 + $0x160] sm:$0xff] %v644
        %767 = vst [vmem:[#allocation2 + $0x168] sm:$0xff] %v647
        %768 = vst [vmem:[#allocation2 + $0x170] sm:$0xff] %v652
        %769 = vst [vmem:[#allocation2 + $0x178] sm:$0xff] %v655
        %770 = vst [vmem:[#allocation2 + $0x180] sm:$0xff] %v660
        %771 = vst [vmem:[#allocation2 + $0x188] sm:$0xff] %v663
        %772 = vst [vmem:[#allocation2 + $0x190] sm:$0xff] %v668
        %773 = vst [vmem:[#allocation2 + $0x198] sm:$0xff] %v671
        %774 = vst [vmem:[#allocation2 + $0x1a0] sm:$0xff] %v676
        %775 = vst [vmem:[#allocation2 + $0x1a8] sm:$0xff] %v679
        %776 = vst [vmem:[#allocation2 + $0x1b0] sm:$0xff] %v684
        %777 = vst [vmem:[#allocation2 + $0x1b8] sm:$0xff] %v687
        %778 = vst [vmem:[#allocation2 + $0x1c0] sm:$0xff] %v692
        %779 = vst [vmem:[#allocation2 + $0x1c8] sm:$0xff] %v695
        %780 = vst [vmem:[#allocation2 + $0x1d0] sm:$0xff] %v700
        %781 = vst [vmem:[#allocation2 + $0x1d8] sm:$0xff] %v703
        %782 = vst [vmem:[#allocation2 + $0x1e0] sm:$0xff] %v708
        %783 = vst [vmem:[#allocation2 + $0x1e8] sm:$0xff] %v711
        %784 = vst [vmem:[#allocation2 + $0x1f0] sm:$0xff] %v716
        %785 = vst [vmem:[#allocation2 + $0x1f8] sm:$0xff] %v719
        %v786 = vld [vmem:[#allocation2] sm:$0xff]
        %v787 = vld [vmem:[#allocation2 + $0x8] sm:$0xff]
        %v788 = vld [vmem:[#allocation2 + $0x10] sm:$0xff]
        %v789 = vld [vmem:[#allocation2 + $0x18] sm:$0xff]
        %v790 = vld [vmem:[#allocation2 + $0x20] sm:$0xff]
        %v791 = vld [vmem:[#allocation2 + $0x28] sm:$0xff]
        %v792 = vld [vmem:[#allocation2 + $0x30] sm:$0xff]
        %v793 = vld [vmem:[#allocation2 + $0x38] sm:$0xff]
        %s794 = scalar_lea.vmem [#allocation2], 384
        %v795 = vld [vmem:[%s794] sm:$0xff]
        %v796 = vld [vmem:[%s794 + $0x8] sm:$0xff]
        %v797 = vld [vmem:[%s794 + $0x10] sm:$0xff]
        %v798 = vld [vmem:[%s794 + $0x18] sm:$0xff]
        %v799 = vld [vmem:[%s794 + $0x20] sm:$0xff]
        %v800 = vld [vmem:[%s794 + $0x28] sm:$0xff]
        %v801 = vld [vmem:[%s794 + $0x30] sm:$0xff]
        %v802 = vld [vmem:[%s794 + $0x38] sm:$0xff]
        %v803 = vld [vmem:[%s3] sm:$0x1]
        %v804 = vsub.f32 %v795, %v786
        %v805 = vsub.f32 %v796, %v787
        %v806 = vsub.f32 %v797, %v788
        %v807 = vsub.f32 %v798, %v789
        %v808 = vsub.f32 %v799, %v790
        %v809 = vsub.f32 %v800, %v791
        %v810 = vsub.f32 %v801, %v792
        %v811 = vsub.f32 %v802, %v793
        %v812 = vlaneseq
        %v813 = vshrl.u32 %v812, 7
        %v814 = vsub.s32 0, %v813
        %v815 = vrot.slane %v803, %v814
        %v816 = vmul.f32 %v815, %v804
        %v817 = vmul.f32 %v815, %v805
        %v818 = vmul.f32 %v815, %v806
        %v819 = vmul.f32 %v815, %v807
        %v820 = vmul.f32 %v815, %v808
        %v821 = vmul.f32 %v815, %v809
        %v822 = vmul.f32 %v815, %v810
        %v823 = vmul.f32 %v815, %v811
        %v824 = vadd.f32 %v786, %v816
        %v825 = vadd.f32 %v787, %v817
        %v826 = vadd.f32 %v788, %v818
        %v827 = vadd.f32 %v789, %v819
        %v828 = vadd.f32 %v790, %v820
        %v829 = vadd.f32 %v791, %v821
        %v830 = vadd.f32 %v792, %v822
        %v831 = vadd.f32 %v793, %v823
        %s832 = scalar_lea.vmem [#allocation2], 256
        %v833 = vld [vmem:[%s832] sm:$0xff]
        %v834 = vld [vmem:[%s832 + $0x8] sm:$0xff]
        %v835 = vld [vmem:[%s832 + $0x10] sm:$0xff]
        %v836 = vld [vmem:[%s832 + $0x18] sm:$0xff]
        %v837 = vld [vmem:[%s832 + $0x20] sm:$0xff]
        %v838 = vld [vmem:[%s832 + $0x28] sm:$0xff]
        %v839 = vld [vmem:[%s832 + $0x30] sm:$0xff]
        %v840 = vld [vmem:[%s832 + $0x38] sm:$0xff]
        %v841 = vld [vmem:[%s3 + $0x4] sm:$0x1]
        %v842 = vsub.f32 %v833, %v786
        %v843 = vsub.f32 %v834, %v787
        %v844 = vsub.f32 %v835, %v788
        %v845 = vsub.f32 %v836, %v789
        %v846 = vsub.f32 %v837, %v790
        %v847 = vsub.f32 %v838, %v791
        %v848 = vsub.f32 %v839, %v792
        %v849 = vsub.f32 %v840, %v793
        %v850 = vlaneseq
        %v851 = vshrl.u32 %v850, 7
        %v852 = vsub.s32 0, %v851
        %v853 = vrot.slane %v841, %v852
        %v854 = vmul.f32 %v853, %v842
        %v855 = vmul.f32 %v853, %v843
        %v856 = vmul.f32 %v853, %v844
        %v857 = vmul.f32 %v853, %v845
        %v858 = vmul.f32 %v853, %v846
        %v859 = vmul.f32 %v853, %v847
        %v860 = vmul.f32 %v853, %v848
        %v861 = vmul.f32 %v853, %v849
        %v862 = vadd.f32 %v824, %v854
        %v863 = vadd.f32 %v825, %v855
        %v864 = vadd.f32 %v826, %v856
        %v865 = vadd.f32 %v827, %v857
        %v866 = vadd.f32 %v828, %v858
        %v867 = vadd.f32 %v829, %v859
        %v868 = vadd.f32 %v830, %v860
        %v869 = vadd.f32 %v831, %v861
        %v870 = vpack.c.bf16 %v863, %v862
        %v871 = vpack.c.bf16 %v865, %v864
        %v872 = vpack.c.bf16 %v867, %v866
        %v873 = vpack.c.bf16 %v869, %v868
        %874 = vst [vmem:[#allocation3] sm:$0xff] %v870
        %875 = vst [vmem:[#allocation3 + $0x8] sm:$0xff] %v871
        %876 = vst [vmem:[#allocation3 + $0x10] sm:$0xff] %v872
        %877 = vst [vmem:[#allocation3 + $0x18] sm:$0xff] %v873
        %v878 = vld [vmem:[#allocation2 + $0x40] sm:$0xff]
        %v879 = vld [vmem:[#allocation2 + $0x48] sm:$0xff]
        %v880 = vld [vmem:[#allocation2 + $0x50] sm:$0xff]
        %v881 = vld [vmem:[#allocation2 + $0x58] sm:$0xff]
        %v882 = vld [vmem:[#allocation2 + $0x60] sm:$0xff]
        %v883 = vld [vmem:[#allocation2 + $0x68] sm:$0xff]
        %v884 = vld [vmem:[#allocation2 + $0x70] sm:$0xff]
        %v885 = vld [vmem:[#allocation2 + $0x78] sm:$0xff]
        %v886 = vld [vmem:[%s794 + $0x40] sm:$0xff]
        %v887 = vld [vmem:[%s794 + $0x48] sm:$0xff]
        %v888 = vld [vmem:[%s794 + $0x50] sm:$0xff]
        %v889 = vld [vmem:[%s794 + $0x58] sm:$0xff]
        %v890 = vld [vmem:[%s794 + $0x60] sm:$0xff]
        %v891 = vld [vmem:[%s794 + $0x68] sm:$0xff]
        %v892 = vld [vmem:[%s794 + $0x70] sm:$0xff]
        %v893 = vld [vmem:[%s794 + $0x78] sm:$0xff]
        %v894 = vld [vmem:[%s3] sm:$0x1]
        %v895 = vsub.f32 %v886, %v878
        %v896 = vsub.f32 %v887, %v879
        %v897 = vsub.f32 %v888, %v880
        %v898 = vsub.f32 %v889, %v881
        %v899 = vsub.f32 %v890, %v882
        %v900 = vsub.f32 %v891, %v883
        %v901 = vsub.f32 %v892, %v884
        %v902 = vsub.f32 %v893, %v885
        %v903 = vlaneseq
        %v904 = vshrl.u32 %v903, 7
        %v905 = vsub.s32 0, %v904
        %v906 = vrot.slane %v894, %v905
        %v907 = vmul.f32 %v906, %v895
        %v908 = vmul.f32 %v906, %v896
        %v909 = vmul.f32 %v906, %v897
        %v910 = vmul.f32 %v906, %v898
        %v911 = vmul.f32 %v906, %v899
        %v912 = vmul.f32 %v906, %v900
        %v913 = vmul.f32 %v906, %v901
        %v914 = vmul.f32 %v906, %v902
        %v915 = vadd.f32 %v878, %v907
        %v916 = vadd.f32 %v879, %v908
        %v917 = vadd.f32 %v880, %v909
        %v918 = vadd.f32 %v881, %v910
        %v919 = vadd.f32 %v882, %v911
        %v920 = vadd.f32 %v883, %v912
        %v921 = vadd.f32 %v884, %v913
        %v922 = vadd.f32 %v885, %v914
        %v923 = vld [vmem:[%s832 + $0x40] sm:$0xff]
        %v924 = vld [vmem:[%s832 + $0x48] sm:$0xff]
        %v925 = vld [vmem:[%s832 + $0x50] sm:$0xff]
        %v926 = vld [vmem:[%s832 + $0x58] sm:$0xff]
        %v927 = vld [vmem:[%s832 + $0x60] sm:$0xff]
        %v928 = vld [vmem:[%s832 + $0x68] sm:$0xff]
        %v929 = vld [vmem:[%s832 + $0x70] sm:$0xff]
        %v930 = vld [vmem:[%s832 + $0x78] sm:$0xff]
        %v931 = vld [vmem:[%s3 + $0x4] sm:$0x1]
        %v932 = vsub.f32 %v923, %v878
        %v933 = vsub.f32 %v924, %v879
        %v934 = vsub.f32 %v925, %v880
        %v935 = vsub.f32 %v926, %v881
        %v936 = vsub.f32 %v927, %v882
        %v937 = vsub.f32 %v928, %v883
        %v938 = vsub.f32 %v929, %v884
        %v939 = vsub.f32 %v930, %v885
        %v940 = vlaneseq
        %v941 = vshrl.u32 %v940, 7
        %v942 = vsub.s32 0, %v941
        %v943 = vrot.slane %v931, %v942
        %v944 = vmul.f32 %v943, %v932
        %v945 = vmul.f32 %v943, %v933
        %v946 = vmul.f32 %v943, %v934
        %v947 = vmul.f32 %v943, %v935
        %v948 = vmul.f32 %v943, %v936
        %v949 = vmul.f32 %v943, %v937
        %v950 = vmul.f32 %v943, %v938
        %v951 = vmul.f32 %v943, %v939
        %v952 = vadd.f32 %v915, %v944
        %v953 = vadd.f32 %v916, %v945
        %v954 = vadd.f32 %v917, %v946
        %v955 = vadd.f32 %v918, %v947
        %v956 = vadd.f32 %v919, %v948
        %v957 = vadd.f32 %v920, %v949
        %v958 = vadd.f32 %v921, %v950
        %v959 = vadd.f32 %v922, %v951
        %v960 = vpack.c.bf16 %v953, %v952
        %v961 = vpack.c.bf16 %v955, %v954
        %v962 = vpack.c.bf16 %v957, %v956
        %v963 = vpack.c.bf16 %v959, %v958
        %964 = vst [vmem:[#allocation3 + $0x20] sm:$0xff] %v960
        %965 = vst [vmem:[#allocation3 + $0x28] sm:$0xff] %v961
        %966 = vst [vmem:[#allocation3 + $0x30] sm:$0xff] %v962
        %967 = vst [vmem:[#allocation3 + $0x38] sm:$0xff] %v963
        %s968 = scalar_lea.vmem [#allocation2], 128
        %v969 = vld [vmem:[%s968] sm:$0xff]
        %v970 = vld [vmem:[%s968 + $0x8] sm:$0xff]
        %v971 = vld [vmem:[%s968 + $0x10] sm:$0xff]
        %v972 = vld [vmem:[%s968 + $0x18] sm:$0xff]
        %v973 = vld [vmem:[%s968 + $0x20] sm:$0xff]
        %v974 = vld [vmem:[%s968 + $0x28] sm:$0xff]
        %v975 = vld [vmem:[%s968 + $0x30] sm:$0xff]
        %v976 = vld [vmem:[%s968 + $0x38] sm:$0xff]
        %v977 = vld [vmem:[#allocation2] sm:$0xff]
        %v978 = vld [vmem:[#allocation2 + $0x8] sm:$0xff]
        %v979 = vld [vmem:[#allocation2 + $0x10] sm:$0xff]
        %v980 = vld [vmem:[#allocation2 + $0x18] sm:$0xff]
        %v981 = vld [vmem:[#allocation2 + $0x20] sm:$0xff]
        %v982 = vld [vmem:[#allocation2 + $0x28] sm:$0xff]
        %v983 = vld [vmem:[#allocation2 + $0x30] sm:$0xff]
        %v984 = vld [vmem:[#allocation2 + $0x38] sm:$0xff]
        %v985 = vld [vmem:[%s3 + $0x1] sm:$0x1]
        %v986 = vsub.f32 %v977, %v969
        %v987 = vsub.f32 %v978, %v970
        %v988 = vsub.f32 %v979, %v971
        %v989 = vsub.f32 %v980, %v972
        %v990 = vsub.f32 %v981, %v973
        %v991 = vsub.f32 %v982, %v974
        %v992 = vsub.f32 %v983, %v975
        %v993 = vsub.f32 %v984, %v976
        %v994 = vlaneseq
        %v995 = vshrl.u32 %v994, 7
        %v996 = vsub.s32 0, %v995
        %v997 = vrot.slane %v985, %v996
        %v998 = vmul.f32 %v997, %v986
        %v999 = vmul.f32 %v997, %v987
        %v1000 = vmul.f32 %v997, %v988
        %v1001 = vmul.f32 %v997, %v989
        %v1002 = vmul.f32 %v997, %v990
        %v1003 = vmul.f32 %v997, %v991
        %v1004 = vmul.f32 %v997, %v992
        %v1005 = vmul.f32 %v997, %v993
        %v1006 = vadd.f32 %v969, %v998
        %v1007 = vadd.f32 %v970, %v999
        %v1008 = vadd.f32 %v971, %v1000
        %v1009 = vadd.f32 %v972, %v1001
        %v1010 = vadd.f32 %v973, %v1002
        %v1011 = vadd.f32 %v974, %v1003
        %v1012 = vadd.f32 %v975, %v1004
        %v1013 = vadd.f32 %v976, %v1005
        %v1014 = vld [vmem:[%s794] sm:$0xff]
        %v1015 = vld [vmem:[%s794 + $0x8] sm:$0xff]
        %v1016 = vld [vmem:[%s794 + $0x10] sm:$0xff]
        %v1017 = vld [vmem:[%s794 + $0x18] sm:$0xff]
        %v1018 = vld [vmem:[%s794 + $0x20] sm:$0xff]
        %v1019 = vld [vmem:[%s794 + $0x28] sm:$0xff]
        %v1020 = vld [vmem:[%s794 + $0x30] sm:$0xff]
        %v1021 = vld [vmem:[%s794 + $0x38] sm:$0xff]
        %v1022 = vld [vmem:[%s3 + $0x5] sm:$0x1]
        %v1023 = vsub.f32 %v1014, %v969
        %v1024 = vsub.f32 %v1015, %v970
        %v1025 = vsub.f32 %v1016, %v971
        %v1026 = vsub.f32 %v1017, %v972
        %v1027 = vsub.f32 %v1018, %v973
        %v1028 = vsub.f32 %v1019, %v974
        %v1029 = vsub.f32 %v1020, %v975
        %v1030 = vsub.f32 %v1021, %v976
        %v1031 = vlaneseq
        %v1032 = vshrl.u32 %v1031, 7
        %v1033 = vsub.s32 0, %v1032
        %v1034 = vrot.slane %v1022, %v1033
        %v1035 = vmul.f32 %v1034, %v1023
        %v1036 = vmul.f32 %v1034, %v1024
        %v1037 = vmul.f32 %v1034, %v1025
        %v1038 = vmul.f32 %v1034, %v1026
        %v1039 = vmul.f32 %v1034, %v1027
        %v1040 = vmul.f32 %v1034, %v1028
        %v1041 = vmul.f32 %v1034, %v1029
        %v1042 = vmul.f32 %v1034, %v1030
        %v1043 = vadd.f32 %v1006, %v1035
        %v1044 = vadd.f32 %v1007, %v1036
        %v1045 = vadd.f32 %v1008, %v1037
        %v1046 = vadd.f32 %v1009, %v1038
        %v1047 = vadd.f32 %v1010, %v1039
        %v1048 = vadd.f32 %v1011, %v1040
        %v1049 = vadd.f32 %v1012, %v1041
        %v1050 = vadd.f32 %v1013, %v1042
        %v1051 = vpack.c.bf16 %v1044, %v1043
        %v1052 = vpack.c.bf16 %v1046, %v1045
        %v1053 = vpack.c.bf16 %v1048, %v1047
        %v1054 = vpack.c.bf16 %v1050, %v1049
        %s1055 = scalar_lea.vmem [#allocation3], 64
        %1056 = vst [vmem:[%s1055] sm:$0xff] %v1051
        %1057 = vst [vmem:[%s1055 + $0x8] sm:$0xff] %v1052
        %1058 = vst [vmem:[%s1055 + $0x10] sm:$0xff] %v1053
        %1059 = vst [vmem:[%s1055 + $0x18] sm:$0xff] %v1054
        %v1060 = vld [vmem:[%s968 + $0x40] sm:$0xff]
        %v1061 = vld [vmem:[%s968 + $0x48] sm:$0xff]
        %v1062 = vld [vmem:[%s968 + $0x50] sm:$0xff]
        %v1063 = vld [vmem:[%s968 + $0x58] sm:$0xff]
        %v1064 = vld [vmem:[%s968 + $0x60] sm:$0xff]
        %v1065 = vld [vmem:[%s968 + $0x68] sm:$0xff]
        %v1066 = vld [vmem:[%s968 + $0x70] sm:$0xff]
        %v1067 = vld [vmem:[%s968 + $0x78] sm:$0xff]
        %v1068 = vld [vmem:[#allocation2 + $0x40] sm:$0xff]
        %v1069 = vld [vmem:[#allocation2 + $0x48] sm:$0xff]
        %v1070 = vld [vmem:[#allocation2 + $0x50] sm:$0xff]
        %v1071 = vld [vmem:[#allocation2 + $0x58] sm:$0xff]
        %v1072 = vld [vmem:[#allocation2 + $0x60] sm:$0xff]
        %v1073 = vld [vmem:[#allocation2 + $0x68] sm:$0xff]
        %v1074 = vld [vmem:[#allocation2 + $0x70] sm:$0xff]
        %v1075 = vld [vmem:[#allocation2 + $0x78] sm:$0xff]
        %v1076 = vld [vmem:[%s3 + $0x1] sm:$0x1]
        %v1077 = vsub.f32 %v1068, %v1060
        %v1078 = vsub.f32 %v1069, %v1061
        %v1079 = vsub.f32 %v1070, %v1062
        %v1080 = vsub.f32 %v1071, %v1063
        %v1081 = vsub.f32 %v1072, %v1064
        %v1082 = vsub.f32 %v1073, %v1065
        %v1083 = vsub.f32 %v1074, %v1066
        %v1084 = vsub.f32 %v1075, %v1067
        %v1085 = vlaneseq
        %v1086 = vshrl.u32 %v1085, 7
        %v1087 = vsub.s32 0, %v1086
        %v1088 = vrot.slane %v1076, %v1087
        %v1089 = vmul.f32 %v1088, %v1077
        %v1090 = vmul.f32 %v1088, %v1078
        %v1091 = vmul.f32 %v1088, %v1079
        %v1092 = vmul.f32 %v1088, %v1080
        %v1093 = vmul.f32 %v1088, %v1081
        %v1094 = vmul.f32 %v1088, %v1082
        %v1095 = vmul.f32 %v1088, %v1083
        %v1096 = vmul.f32 %v1088, %v1084
        %v1097 = vadd.f32 %v1060, %v1089
        %v1098 = vadd.f32 %v1061, %v1090
        %v1099 = vadd.f32 %v1062, %v1091
        %v1100 = vadd.f32 %v1063, %v1092
        %v1101 = vadd.f32 %v1064, %v1093
        %v1102 = vadd.f32 %v1065, %v1094
        %v1103 = vadd.f32 %v1066, %v1095
        %v1104 = vadd.f32 %v1067, %v1096
        %v1105 = vld [vmem:[%s794 + $0x40] sm:$0xff]
        %v1106 = vld [vmem:[%s794 + $0x48] sm:$0xff]
        %v1107 = vld [vmem:[%s794 + $0x50] sm:$0xff]
        %v1108 = vld [vmem:[%s794 + $0x58] sm:$0xff]
        %v1109 = vld [vmem:[%s794 + $0x60] sm:$0xff]
        %v1110 = vld [vmem:[%s794 + $0x68] sm:$0xff]
        %v1111 = vld [vmem:[%s794 + $0x70] sm:$0xff]
        %v1112 = vld [vmem:[%s794 + $0x78] sm:$0xff]
        %v1113 = vld [vmem:[%s3 + $0x5] sm:$0x1]
        %v1114 = vsub.f32 %v1105, %v1060
        %v1115 = vsub.f32 %v1106, %v1061
        %v1116 = vsub.f32 %v1107, %v1062
        %v1117 = vsub.f32 %v1108, %v1063
        %v1118 = vsub.f32 %v1109, %v1064
        %v1119 = vsub.f32 %v1110, %v1065
        %v1120 = vsub.f32 %v1111, %v1066
        %v1121 = vsub.f32 %v1112, %v1067
        %v1122 = vlaneseq
        %v1123 = vshrl.u32 %v1122, 7
        %v1124 = vsub.s32 0, %v1123
        %v1125 = vrot.slane %v1113, %v1124
        %v1126 = vmul.f32 %v1125, %v1114
        %v1127 = vmul.f32 %v1125, %v1115
        %v1128 = vmul.f32 %v1125, %v1116
        %v1129 = vmul.f32 %v1125, %v1117
        %v1130 = vmul.f32 %v1125, %v1118
        %v1131 = vmul.f32 %v1125, %v1119
        %v1132 = vmul.f32 %v1125, %v1120
        %v1133 = vmul.f32 %v1125, %v1121
        %v1134 = vadd.f32 %v1097, %v1126
        %v1135 = vadd.f32 %v1098, %v1127
        %v1136 = vadd.f32 %v1099, %v1128
        %v1137 = vadd.f32 %v1100, %v1129
        %v1138 = vadd.f32 %v1101, %v1130
        %v1139 = vadd.f32 %v1102, %v1131
        %v1140 = vadd.f32 %v1103, %v1132
        %v1141 = vadd.f32 %v1104, %v1133
        %v1142 = vpack.c.bf16 %v1135, %v1134
        %v1143 = vpack.c.bf16 %v1137, %v1136
        %v1144 = vpack.c.bf16 %v1139, %v1138
        %v1145 = vpack.c.bf16 %v1141, %v1140
        %1146 = vst [vmem:[%s1055 + $0x20] sm:$0xff] %v1142
        %1147 = vst [vmem:[%s1055 + $0x28] sm:$0xff] %v1143
        %1148 = vst [vmem:[%s1055 + $0x30] sm:$0xff] %v1144
        %1149 = vst [vmem:[%s1055 + $0x38] sm:$0xff] %v1145
        %v1150 = vld [vmem:[%s832] sm:$0xff]
        %v1151 = vld [vmem:[%s832 + $0x8] sm:$0xff]
        %v1152 = vld [vmem:[%s832 + $0x10] sm:$0xff]
        %v1153 = vld [vmem:[%s832 + $0x18] sm:$0xff]
        %v1154 = vld [vmem:[%s832 + $0x20] sm:$0xff]
        %v1155 = vld [vmem:[%s832 + $0x28] sm:$0xff]
        %v1156 = vld [vmem:[%s832 + $0x30] sm:$0xff]
        %v1157 = vld [vmem:[%s832 + $0x38] sm:$0xff]
        %v1158 = vld [vmem:[%s968] sm:$0xff]
        %v1159 = vld [vmem:[%s968 + $0x8] sm:$0xff]
        %v1160 = vld [vmem:[%s968 + $0x10] sm:$0xff]
        %v1161 = vld [vmem:[%s968 + $0x18] sm:$0xff]
        %v1162 = vld [vmem:[%s968 + $0x20] sm:$0xff]
        %v1163 = vld [vmem:[%s968 + $0x28] sm:$0xff]
        %v1164 = vld [vmem:[%s968 + $0x30] sm:$0xff]
        %v1165 = vld [vmem:[%s968 + $0x38] sm:$0xff]
        %v1166 = vld [vmem:[%s3 + $0x2] sm:$0x1]
        %v1167 = vsub.f32 %v1158, %v1150
        %v1168 = vsub.f32 %v1159, %v1151
        %v1169 = vsub.f32 %v1160, %v1152
        %v1170 = vsub.f32 %v1161, %v1153
        %v1171 = vsub.f32 %v1162, %v1154
        %v1172 = vsub.f32 %v1163, %v1155
        %v1173 = vsub.f32 %v1164, %v1156
        %v1174 = vsub.f32 %v1165, %v1157
        %v1175 = vlaneseq
        %v1176 = vshrl.u32 %v1175, 7
        %v1177 = vsub.s32 0, %v1176
        %v1178 = vrot.slane %v1166, %v1177
        %v1179 = vmul.f32 %v1178, %v1167
        %v1180 = vmul.f32 %v1178, %v1168
        %v1181 = vmul.f32 %v1178, %v1169
        %v1182 = vmul.f32 %v1178, %v1170
        %v1183 = vmul.f32 %v1178, %v1171
        %v1184 = vmul.f32 %v1178, %v1172
        %v1185 = vmul.f32 %v1178, %v1173
        %v1186 = vmul.f32 %v1178, %v1174
        %v1187 = vadd.f32 %v1150, %v1179
        %v1188 = vadd.f32 %v1151, %v1180
        %v1189 = vadd.f32 %v1152, %v1181
        %v1190 = vadd.f32 %v1153, %v1182
        %v1191 = vadd.f32 %v1154, %v1183
        %v1192 = vadd.f32 %v1155, %v1184
        %v1193 = vadd.f32 %v1156, %v1185
        %v1194 = vadd.f32 %v1157, %v1186
        %v1195 = vld [vmem:[#allocation2] sm:$0xff]
        %v1196 = vld [vmem:[#allocation2 + $0x8] sm:$0xff]
        %v1197 = vld [vmem:[#allocation2 + $0x10] sm:$0xff]
        %v1198 = vld [vmem:[#allocation2 + $0x18] sm:$0xff]
        %v1199 = vld [vmem:[#allocation2 + $0x20] sm:$0xff]
        %v1200 = vld [vmem:[#allocation2 + $0x28] sm:$0xff]
        %v1201 = vld [vmem:[#allocation2 + $0x30] sm:$0xff]
        %v1202 = vld [vmem:[#allocation2 + $0x38] sm:$0xff]
        %v1203 = vld [vmem:[%s3 + $0x6] sm:$0x1]
        %v1204 = vsub.f32 %v1195, %v1150
        %v1205 = vsub.f32 %v1196, %v1151
        %v1206 = vsub.f32 %v1197, %v1152
        %v1207 = vsub.f32 %v1198, %v1153
        %v1208 = vsub.f32 %v1199, %v1154
        %v1209 = vsub.f32 %v1200, %v1155
        %v1210 = vsub.f32 %v1201, %v1156
        %v1211 = vsub.f32 %v1202, %v1157
        %v1212 = vlaneseq
        %v1213 = vshrl.u32 %v1212, 7
        %v1214 = vsub.s32 0, %v1213
        %v1215 = vrot.slane %v1203, %v1214
        %v1216 = vmul.f32 %v1215, %v1204
        %v1217 = vmul.f32 %v1215, %v1205
        %v1218 = vmul.f32 %v1215, %v1206
        %v1219 = vmul.f32 %v1215, %v1207
        %v1220 = vmul.f32 %v1215, %v1208
        %v1221 = vmul.f32 %v1215, %v1209
        %v1222 = vmul.f32 %v1215, %v1210
        %v1223 = vmul.f32 %v1215, %v1211
        %v1224 = vadd.f32 %v1187, %v1216
        %v1225 = vadd.f32 %v1188, %v1217
        %v1226 = vadd.f32 %v1189, %v1218
        %v1227 = vadd.f32 %v1190, %v1219
        %v1228 = vadd.f32 %v1191, %v1220
        %v1229 = vadd.f32 %v1192, %v1221
        %v1230 = vadd.f32 %v1193, %v1222
        %v1231 = vadd.f32 %v1194, %v1223
        %v1232 = vpack.c.bf16 %v1225, %v1224
        %v1233 = vpack.c.bf16 %v1227, %v1226
        %v1234 = vpack.c.bf16 %v1229, %v1228
        %v1235 = vpack.c.bf16 %v1231, %v1230
        %s1236 = scalar_lea.vmem [#allocation3], 128
        %1237 = vst [vmem:[%s1236] sm:$0xff] %v1232
        %1238 = vst [vmem:[%s1236 + $0x8] sm:$0xff] %v1233
        %1239 = vst [vmem:[%s1236 + $0x10] sm:$0xff] %v1234
        %1240 = vst [vmem:[%s1236 + $0x18] sm:$0xff] %v1235
        %v1241 = vld [vmem:[%s832 + $0x40] sm:$0xff]
        %v1242 = vld [vmem:[%s832 + $0x48] sm:$0xff]
        %v1243 = vld [vmem:[%s832 + $0x50] sm:$0xff]
        %v1244 = vld [vmem:[%s832 + $0x58] sm:$0xff]
        %v1245 = vld [vmem:[%s832 + $0x60] sm:$0xff]
        %v1246 = vld [vmem:[%s832 + $0x68] sm:$0xff]
        %v1247 = vld [vmem:[%s832 + $0x70] sm:$0xff]
        %v1248 = vld [vmem:[%s832 + $0x78] sm:$0xff]
        %v1249 = vld [vmem:[%s968 + $0x40] sm:$0xff]
        %v1250 = vld [vmem:[%s968 + $0x48] sm:$0xff]
        %v1251 = vld [vmem:[%s968 + $0x50] sm:$0xff]
        %v1252 = vld [vmem:[%s968 + $0x58] sm:$0xff]
        %v1253 = vld [vmem:[%s968 + $0x60] sm:$0xff]
        %v1254 = vld [vmem:[%s968 + $0x68] sm:$0xff]
        %v1255 = vld [vmem:[%s968 + $0x70] sm:$0xff]
        %v1256 = vld [vmem:[%s968 + $0x78] sm:$0xff]
        %v1257 = vld [vmem:[%s3 + $0x2] sm:$0x1]
        %v1258 = vsub.f32 %v1249, %v1241
        %v1259 = vsub.f32 %v1250, %v1242
        %v1260 = vsub.f32 %v1251, %v1243
        %v1261 = vsub.f32 %v1252, %v1244
        %v1262 = vsub.f32 %v1253, %v1245
        %v1263 = vsub.f32 %v1254, %v1246
        %v1264 = vsub.f32 %v1255, %v1247
        %v1265 = vsub.f32 %v1256, %v1248
        %v1266 = vlaneseq
        %v1267 = vshrl.u32 %v1266, 7
        %v1268 = vsub.s32 0, %v1267
        %v1269 = vrot.slane %v1257, %v1268
        %v1270 = vmul.f32 %v1269, %v1258
        %v1271 = vmul.f32 %v1269, %v1259
        %v1272 = vmul.f32 %v1269, %v1260
        %v1273 = vmul.f32 %v1269, %v1261
        %v1274 = vmul.f32 %v1269, %v1262
        %v1275 = vmul.f32 %v1269, %v1263
        %v1276 = vmul.f32 %v1269, %v1264
        %v1277 = vmul.f32 %v1269, %v1265
        %v1278 = vadd.f32 %v1241, %v1270
        %v1279 = vadd.f32 %v1242, %v1271
        %v1280 = vadd.f32 %v1243, %v1272
        %v1281 = vadd.f32 %v1244, %v1273
        %v1282 = vadd.f32 %v1245, %v1274
        %v1283 = vadd.f32 %v1246, %v1275
        %v1284 = vadd.f32 %v1247, %v1276
        %v1285 = vadd.f32 %v1248, %v1277
        %v1286 = vld [vmem:[#allocation2 + $0x40] sm:$0xff]
        %v1287 = vld [vmem:[#allocation2 + $0x48] sm:$0xff]
        %v1288 = vld [vmem:[#allocation2 + $0x50] sm:$0xff]
        %v1289 = vld [vmem:[#allocation2 + $0x58] sm:$0xff]
        %v1290 = vld [vmem:[#allocation2 + $0x60] sm:$0xff]
        %v1291 = vld [vmem:[#allocation2 + $0x68] sm:$0xff]
        %v1292 = vld [vmem:[#allocation2 + $0x70] sm:$0xff]
        %v1293 = vld [vmem:[#allocation2 + $0x78] sm:$0xff]
        %v1294 = vld [vmem:[%s3 + $0x6] sm:$0x1]
        %v1295 = vsub.f32 %v1286, %v1241
        %v1296 = vsub.f32 %v1287, %v1242
        %v1297 = vsub.f32 %v1288, %v1243
        %v1298 = vsub.f32 %v1289, %v1244
        %v1299 = vsub.f32 %v1290, %v1245
        %v1300 = vsub.f32 %v1291, %v1246
        %v1301 = vsub.f32 %v1292, %v1247
        %v1302 = vsub.f32 %v1293, %v1248
        %v1303 = vlaneseq
        %v1304 = vshrl.u32 %v1303, 7
        %v1305 = vsub.s32 0, %v1304
        %v1306 = vrot.slane %v1294, %v1305
        %v1307 = vmul.f32 %v1306, %v1295
        %v1308 = vmul.f32 %v1306, %v1296
        %v1309 = vmul.f32 %v1306, %v1297
        %v1310 = vmul.f32 %v1306, %v1298
        %v1311 = vmul.f32 %v1306, %v1299
        %v1312 = vmul.f32 %v1306, %v1300
        %v1313 = vmul.f32 %v1306, %v1301
        %v1314 = vmul.f32 %v1306, %v1302
        %v1315 = vadd.f32 %v1278, %v1307
        %v1316 = vadd.f32 %v1279, %v1308
        %v1317 = vadd.f32 %v1280, %v1309
        %v1318 = vadd.f32 %v1281, %v1310
        %v1319 = vadd.f32 %v1282, %v1311
        %v1320 = vadd.f32 %v1283, %v1312
        %v1321 = vadd.f32 %v1284, %v1313
        %v1322 = vadd.f32 %v1285, %v1314
        %v1323 = vpack.c.bf16 %v1316, %v1315
        %v1324 = vpack.c.bf16 %v1318, %v1317
        %v1325 = vpack.c.bf16 %v1320, %v1319
        %v1326 = vpack.c.bf16 %v1322, %v1321
        %1327 = vst [vmem:[%s1236 + $0x20] sm:$0xff] %v1323
        %1328 = vst [vmem:[%s1236 + $0x28] sm:$0xff] %v1324
        %1329 = vst [vmem:[%s1236 + $0x30] sm:$0xff] %v1325
        %1330 = vst [vmem:[%s1236 + $0x38] sm:$0xff] %v1326
        %v1331 = vld [vmem:[%s794] sm:$0xff]
        %v1332 = vld [vmem:[%s794 + $0x8] sm:$0xff]
        %v1333 = vld [vmem:[%s794 + $0x10] sm:$0xff]
        %v1334 = vld [vmem:[%s794 + $0x18] sm:$0xff]
        %v1335 = vld [vmem:[%s794 + $0x20] sm:$0xff]
        %v1336 = vld [vmem:[%s794 + $0x28] sm:$0xff]
        %v1337 = vld [vmem:[%s794 + $0x30] sm:$0xff]
        %v1338 = vld [vmem:[%s794 + $0x38] sm:$0xff]
        %v1339 = vld [vmem:[%s832] sm:$0xff]
        %v1340 = vld [vmem:[%s832 + $0x8] sm:$0xff]
        %v1341 = vld [vmem:[%s832 + $0x10] sm:$0xff]
        %v1342 = vld [vmem:[%s832 + $0x18] sm:$0xff]
        %v1343 = vld [vmem:[%s832 + $0x20] sm:$0xff]
        %v1344 = vld [vmem:[%s832 + $0x28] sm:$0xff]
        %v1345 = vld [vmem:[%s832 + $0x30] sm:$0xff]
        %v1346 = vld [vmem:[%s832 + $0x38] sm:$0xff]
        %v1347 = vld [vmem:[%s3 + $0x3] sm:$0x1]
        %v1348 = vsub.f32 %v1339, %v1331
        %v1349 = vsub.f32 %v1340, %v1332
        %v1350 = vsub.f32 %v1341, %v1333
        %v1351 = vsub.f32 %v1342, %v1334
        %v1352 = vsub.f32 %v1343, %v1335
        %v1353 = vsub.f32 %v1344, %v1336
        %v1354 = vsub.f32 %v1345, %v1337
        %v1355 = vsub.f32 %v1346, %v1338
        %v1356 = vlaneseq
        %v1357 = vshrl.u32 %v1356, 7
        %v1358 = vsub.s32 0, %v1357
        %v1359 = vrot.slane %v1347, %v1358
        %v1360 = vmul.f32 %v1359, %v1348
        %v1361 = vmul.f32 %v1359, %v1349
        %v1362 = vmul.f32 %v1359, %v1350
        %v1363 = vmul.f32 %v1359, %v1351
        %v1364 = vmul.f32 %v1359, %v1352
        %v1365 = vmul.f32 %v1359, %v1353
        %v1366 = vmul.f32 %v1359, %v1354
        %v1367 = vmul.f32 %v1359, %v1355
        %v1368 = vadd.f32 %v1331, %v1360
        %v1369 = vadd.f32 %v1332, %v1361
        %v1370 = vadd.f32 %v1333, %v1362
        %v1371 = vadd.f32 %v1334, %v1363
        %v1372 = vadd.f32 %v1335, %v1364
        %v1373 = vadd.f32 %v1336, %v1365
        %v1374 = vadd.f32 %v1337, %v1366
        %v1375 = vadd.f32 %v1338, %v1367
        %v1376 = vld [vmem:[%s968] sm:$0xff]
        %v1377 = vld [vmem:[%s968 + $0x8] sm:$0xff]
        %v1378 = vld [vmem:[%s968 + $0x10] sm:$0xff]
        %v1379 = vld [vmem:[%s968 + $0x18] sm:$0xff]
        %v1380 = vld [vmem:[%s968 + $0x20] sm:$0xff]
        %v1381 = vld [vmem:[%s968 + $0x28] sm:$0xff]
        %v1382 = vld [vmem:[%s968 + $0x30] sm:$0xff]
        %v1383 = vld [vmem:[%s968 + $0x38] sm:$0xff]
        %v1384 = vld [vmem:[%s3 + $0x7] sm:$0x1]
        %v1385 = vsub.f32 %v1376, %v1331
        %v1386 = vsub.f32 %v1377, %v1332
        %v1387 = vsub.f32 %v1378, %v1333
        %v1388 = vsub.f32 %v1379, %v1334
        %v1389 = vsub.f32 %v1380, %v1335
        %v1390 = vsub.f32 %v1381, %v1336
        %v1391 = vsub.f32 %v1382, %v1337
        %v1392 = vsub.f32 %v1383, %v1338
        %v1393 = vlaneseq
        %v1394 = vshrl.u32 %v1393, 7
        %v1395 = vsub.s32 0, %v1394
        %v1396 = vrot.slane %v1384, %v1395
        %v1397 = vmul.f32 %v1396, %v1385
        %v1398 = vmul.f32 %v1396, %v1386
        %v1399 = vmul.f32 %v1396, %v1387
        %v1400 = vmul.f32 %v1396, %v1388
        %v1401 = vmul.f32 %v1396, %v1389
        %v1402 = vmul.f32 %v1396, %v1390
        %v1403 = vmul.f32 %v1396, %v1391
        %v1404 = vmul.f32 %v1396, %v1392
        %v1405 = vadd.f32 %v1368, %v1397
        %v1406 = vadd.f32 %v1369, %v1398
        %v1407 = vadd.f32 %v1370, %v1399
        %v1408 = vadd.f32 %v1371, %v1400
        %v1409 = vadd.f32 %v1372, %v1401
        %v1410 = vadd.f32 %v1373, %v1402
        %v1411 = vadd.f32 %v1374, %v1403
        %v1412 = vadd.f32 %v1375, %v1404
        %v1413 = vpack.c.bf16 %v1406, %v1405
        %v1414 = vpack.c.bf16 %v1408, %v1407
        %v1415 = vpack.c.bf16 %v1410, %v1409
        %v1416 = vpack.c.bf16 %v1412, %v1411
        %s1417 = scalar_lea.vmem [#allocation3], 192
        %1418 = vst [vmem:[%s1417] sm:$0xff] %v1413
        %1419 = vst [vmem:[%s1417 + $0x8] sm:$0xff] %v1414
        %1420 = vst [vmem:[%s1417 + $0x10] sm:$0xff] %v1415
        %1421 = vst [vmem:[%s1417 + $0x18] sm:$0xff] %v1416
        %v1422 = vld [vmem:[%s794 + $0x40] sm:$0xff]
        %v1423 = vld [vmem:[%s794 + $0x48] sm:$0xff]
        %v1424 = vld [vmem:[%s794 + $0x50] sm:$0xff]
        %v1425 = vld [vmem:[%s794 + $0x58] sm:$0xff]
        %v1426 = vld [vmem:[%s794 + $0x60] sm:$0xff]
        %v1427 = vld [vmem:[%s794 + $0x68] sm:$0xff]
        %v1428 = vld [vmem:[%s794 + $0x70] sm:$0xff]
        %v1429 = vld [vmem:[%s794 + $0x78] sm:$0xff]
        %v1430 = vld [vmem:[%s832 + $0x40] sm:$0xff]
        %v1431 = vld [vmem:[%s832 + $0x48] sm:$0xff]
        %v1432 = vld [vmem:[%s832 + $0x50] sm:$0xff]
        %v1433 = vld [vmem:[%s832 + $0x58] sm:$0xff]
        %v1434 = vld [vmem:[%s832 + $0x60] sm:$0xff]
        %v1435 = vld [vmem:[%s832 + $0x68] sm:$0xff]
        %v1436 = vld [vmem:[%s832 + $0x70] sm:$0xff]
        %v1437 = vld [vmem:[%s832 + $0x78] sm:$0xff]
        %v1438 = vld [vmem:[%s3 + $0x3] sm:$0x1]
        %v1439 = vsub.f32 %v1430, %v1422
        %v1440 = vsub.f32 %v1431, %v1423
        %v1441 = vsub.f32 %v1432, %v1424
        %v1442 = vsub.f32 %v1433, %v1425
        %v1443 = vsub.f32 %v1434, %v1426
        %v1444 = vsub.f32 %v1435, %v1427
        %v1445 = vsub.f32 %v1436, %v1428
        %v1446 = vsub.f32 %v1437, %v1429
        %v1447 = vlaneseq
        %v1448 = vshrl.u32 %v1447, 7
        %v1449 = vsub.s32 0, %v1448
        %v1450 = vrot.slane %v1438, %v1449
        %v1451 = vmul.f32 %v1450, %v1439
        %v1452 = vmul.f32 %v1450, %v1440
        %v1453 = vmul.f32 %v1450, %v1441
        %v1454 = vmul.f32 %v1450, %v1442
        %v1455 = vmul.f32 %v1450, %v1443
        %v1456 = vmul.f32 %v1450, %v1444
        %v1457 = vmul.f32 %v1450, %v1445
        %v1458 = vmul.f32 %v1450, %v1446
        %v1459 = vadd.f32 %v1422, %v1451
        %v1460 = vadd.f32 %v1423, %v1452
        %v1461 = vadd.f32 %v1424, %v1453
        %v1462 = vadd.f32 %v1425, %v1454
        %v1463 = vadd.f32 %v1426, %v1455
        %v1464 = vadd.f32 %v1427, %v1456
        %v1465 = vadd.f32 %v1428, %v1457
        %v1466 = vadd.f32 %v1429, %v1458
        %v1467 = vld [vmem:[%s968 + $0x40] sm:$0xff]
        %v1468 = vld [vmem:[%s968 + $0x48] sm:$0xff]
        %v1469 = vld [vmem:[%s968 + $0x50] sm:$0xff]
        %v1470 = vld [vmem:[%s968 + $0x58] sm:$0xff]
        %v1471 = vld [vmem:[%s968 + $0x60] sm:$0xff]
        %v1472 = vld [vmem:[%s968 + $0x68] sm:$0xff]
        %v1473 = vld [vmem:[%s968 + $0x70] sm:$0xff]
        %v1474 = vld [vmem:[%s968 + $0x78] sm:$0xff]
        %v1475 = vld [vmem:[%s3 + $0x7] sm:$0x1]
        %v1476 = vsub.f32 %v1467, %v1422
        %v1477 = vsub.f32 %v1468, %v1423
        %v1478 = vsub.f32 %v1469, %v1424
        %v1479 = vsub.f32 %v1470, %v1425
        %v1480 = vsub.f32 %v1471, %v1426
        %v1481 = vsub.f32 %v1472, %v1427
        %v1482 = vsub.f32 %v1473, %v1428
        %v1483 = vsub.f32 %v1474, %v1429
        %v1484 = vlaneseq
        %v1485 = vshrl.u32 %v1484, 7
        %v1486 = vsub.s32 0, %v1485
        %v1487 = vrot.slane %v1475, %v1486
        %v1488 = vmul.f32 %v1487, %v1476
        %v1489 = vmul.f32 %v1487, %v1477
        %v1490 = vmul.f32 %v1487, %v1478
        %v1491 = vmul.f32 %v1487, %v1479
        %v1492 = vmul.f32 %v1487, %v1480
        %v1493 = vmul.f32 %v1487, %v1481
        %v1494 = vmul.f32 %v1487, %v1482
        %v1495 = vmul.f32 %v1487, %v1483
        %v1496 = vadd.f32 %v1459, %v1488
        %v1497 = vadd.f32 %v1460, %v1489
        %v1498 = vadd.f32 %v1461, %v1490
        %v1499 = vadd.f32 %v1462, %v1491
        %v1500 = vadd.f32 %v1463, %v1492
        %v1501 = vadd.f32 %v1464, %v1493
        %v1502 = vadd.f32 %v1465, %v1494
        %v1503 = vadd.f32 %v1466, %v1495
        %v1504 = vpack.c.bf16 %v1497, %v1496
        %v1505 = vpack.c.bf16 %v1499, %v1498
        %v1506 = vpack.c.bf16 %v1501, %v1500
        %v1507 = vpack.c.bf16 %v1503, %v1502
        %1508 = vst [vmem:[%s1417 + $0x20] sm:$0xff] %v1504
        %1509 = vst [vmem:[%s1417 + $0x28] sm:$0xff] %v1505
        %1510 = vst [vmem:[%s1417 + $0x30] sm:$0xff] %v1506
        %1511 = vst [vmem:[%s1417 + $0x38] sm:$0xff] %v1507
        %v1512 = vld [vmem:[#allocation3] sm:$0xff]
        %v1513 = vld [vmem:[#allocation3 + $0x8] sm:$0xff]
        %v1514 = vld [vmem:[#allocation3 + $0x10] sm:$0xff]
        %v1515 = vld [vmem:[#allocation3 + $0x18] sm:$0xff]
        %v1516 = vld [vmem:[#allocation3 + $0x20] sm:$0xff]
        %v1517 = vld [vmem:[#allocation3 + $0x28] sm:$0xff]
        %v1518 = vld [vmem:[#allocation3 + $0x30] sm:$0xff]
        %v1519 = vld [vmem:[#allocation3 + $0x38] sm:$0xff]
        %v1520 = vld [vmem:[#allocation3 + $0x40] sm:$0xff]
        %v1521 = vld [vmem:[#allocation3 + $0x48] sm:$0xff]
        %v1522 = vld [vmem:[#allocation3 + $0x50] sm:$0xff]
        %v1523 = vld [vmem:[#allocation3 + $0x58] sm:$0xff]
        %v1524 = vld [vmem:[#allocation3 + $0x60] sm:$0xff]
        %v1525 = vld [vmem:[#allocation3 + $0x68] sm:$0xff]
        %v1526 = vld [vmem:[#allocation3 + $0x70] sm:$0xff]
        %v1527 = vld [vmem:[#allocation3 + $0x78] sm:$0xff]
        %v1528 = vld [vmem:[#allocation3 + $0x80] sm:$0xff]
        %v1529 = vld [vmem:[#allocation3 + $0x88] sm:$0xff]
        %v1530 = vld [vmem:[#allocation3 + $0x90] sm:$0xff]
        %v1531 = vld [vmem:[#allocation3 + $0x98] sm:$0xff]
        %v1532 = vld [vmem:[#allocation3 + $0xa0] sm:$0xff]
        %v1533 = vld [vmem:[#allocation3 + $0xa8] sm:$0xff]
        %v1534 = vld [vmem:[#allocation3 + $0xb0] sm:$0xff]
        %v1535 = vld [vmem:[#allocation3 + $0xb8] sm:$0xff]
        %v1536 = vld [vmem:[#allocation3 + $0xc0] sm:$0xff]
        %v1537 = vld [vmem:[#allocation3 + $0xc8] sm:$0xff]
        %v1538 = vld [vmem:[#allocation3 + $0xd0] sm:$0xff]
        %v1539 = vld [vmem:[#allocation3 + $0xd8] sm:$0xff]
        %v1540 = vld [vmem:[#allocation3 + $0xe0] sm:$0xff]
        %v1541 = vld [vmem:[#allocation3 + $0xe8] sm:$0xff]
        %v1542 = vld [vmem:[#allocation3 + $0xf0] sm:$0xff]
        %v1543 = vld [vmem:[#allocation3 + $0xf8] sm:$0xff]
        %v1544 = vld [vmem:[#allocation9] sm:$0xf]
        %v1545 = vld [vmem:[#allocation9 + $0x4] sm:$0xf]
        %v1546 = vld [vmem:[#allocation9 + $0x8] sm:$0xf]
        %v1547 = vld [vmem:[#allocation9 + $0xc] sm:$0xf]
        %v1548 = vld [vmem:[#allocation9 + $0x10] sm:$0xf]
        %v1549 = vld [vmem:[#allocation9 + $0x14] sm:$0xf]
        %v1550 = vld [vmem:[#allocation9 + $0x18] sm:$0xf]
        %v1551 = vld [vmem:[#allocation9 + $0x1c] sm:$0xf]
        %v1552 = vld [vmem:[#allocation9 + $0x20] sm:$0xf]
        %v1553 = vld [vmem:[#allocation9 + $0x24] sm:$0xf]
        %v1554 = vld [vmem:[#allocation9 + $0x28] sm:$0xf]
        %v1555 = vld [vmem:[#allocation9 + $0x2c] sm:$0xf]
        %v1556 = vld [vmem:[#allocation9 + $0x30] sm:$0xf]
        %v1557 = vld [vmem:[#allocation9 + $0x34] sm:$0xf]
        %v1558 = vld [vmem:[#allocation9 + $0x38] sm:$0xf]
        %v1559 = vld [vmem:[#allocation9 + $0x3c] sm:$0xf]
        %v1576 = vunpack.c.l.b16 %v1544
        %v1577 = vunpack.c.l.b16 %v1545
        %v1578 = vunpack.c.l.b16 %v1546
        %v1579 = vunpack.c.l.b16 %v1547
        %v1580 = vunpack.c.l.b16 %v1548
        %v1581 = vunpack.c.l.b16 %v1549
        %v1582 = vunpack.c.l.b16 %v1550
        %v1583 = vunpack.c.l.b16 %v1551
        %v1584 = vunpack.c.l.b16 %v1552
        %v1585 = vunpack.c.l.b16 %v1553
        %v1586 = vunpack.c.l.b16 %v1554
        %v1587 = vunpack.c.l.b16 %v1555
        %v1588 = vunpack.c.l.b16 %v1556
        %v1589 = vunpack.c.l.b16 %v1557
        %v1590 = vunpack.c.l.b16 %v1558
        %v1591 = vunpack.c.l.b16 %v1559
        %v1592 = vpack.c.b16 %v1577, %v1576
        %v1593 = vpack.c.b16 %v1579, %v1578
        %v1594 = vpack.c.b16 %v1581, %v1580
        %v1595 = vpack.c.b16 %v1583, %v1582
        %v1596 = vpack.c.b16 %v1585, %v1584
        %v1597 = vpack.c.b16 %v1587, %v1586
        %v1598 = vpack.c.b16 %v1589, %v1588
        %v1599 = vpack.c.b16 %v1591, %v1590
        %1608 = vmatprep.subr.bf16.mxu0 0
        %1609 = vmatpush1.bf16.msra.mxu0 %v1592
        %1610 = vmatprep.subr.bf16.mxu0 0
        %1611 = vmatpush1.bf16.msra.mxu0 %v1593
        %1612 = vmatprep.subr.bf16.mxu0 0
        %1613 = vmatpush1.bf16.msra.mxu0 %v1594
        %1614 = vmatprep.subr.bf16.mxu0 0
        %1615 = vmatpush1.bf16.msra.mxu0 %v1595
        %1616 = vmatprep.subr.bf16.mxu0 0
        %1617 = vmatpush1.bf16.msra.mxu0 %v1596
        %1618 = vmatprep.subr.bf16.mxu0 0
        %1619 = vmatpush1.bf16.msra.mxu0 %v1597
        %1620 = vmatprep.subr.bf16.mxu0 0
        %1621 = vmatpush1.bf16.msra.mxu0 %v1598
        %1622 = vmatprep.subr.bf16.mxu0 0
        %1623 = vmatpush1.bf16.msra.mxu0 %v1599
        %1624 = vmatprep.subr.bf16.mxu0 0
        %1625 = vmatpush1.bf16.msra.mxu0 0
        %1626 = vmatprep.subr.bf16.mxu0 0
        %1627 = vmatpush1.bf16.msra.mxu0 0
        %1628 = vmatprep.subr.bf16.mxu0 0
        %1629 = vmatpush1.bf16.msra.mxu0 0
        %1630 = vmatprep.subr.bf16.mxu0 0
        %1631 = vmatpush1.bf16.msra.mxu0 0
        %1632 = vmatprep.subr.bf16.mxu0 0
        %1633 = vmatpush1.bf16.msra.mxu0 0
        %1634 = vmatprep.subr.bf16.mxu0 0
        %1635 = vmatpush1.bf16.msra.mxu0 0
        %1636 = vmatprep.subr.bf16.mxu0 0
        %1637 = vmatpush1.bf16.msra.mxu0 0
        %1638 = vmatprep.subr.bf16.mxu0 0
        %1639 = vmatpush1.bf16.msra.mxu0 0
        %1640 = vmatprep.mubr.bf16.mxu0 0
        %1641 = vmatmul.mubr.bf16.gmra.mrb[0].mxu0 %v1512
        %v1642 = vpop.f32.mrb[0].mxu0
        %v1643 = vadd.f32 0.0, %v1642
        %v1644 = vpop.f32.mrb[0].mxu0
        %v1645 = vpop.f32.mrb[0].mxu0
        %v1646 = vadd.f32 0.0, %v1645
        %v1647 = vpop.f32.mrb[0].mxu0
        %1648 = vmatprep.mubr.bf16.mxu0 0
        %1649 = vmatmul.mubr.bf16.gmra.mrb[0].mxu0 %v1513
        %v1650 = vpop.f32.mrb[0].mxu0
        %v1651 = vadd.f32 0.0, %v1650
        %v1652 = vpop.f32.mrb[0].mxu0
        %v1653 = vpop.f32.mrb[0].mxu0
        %v1654 = vadd.f32 0.0, %v1653
        %v1655 = vpop.f32.mrb[0].mxu0
        %1656 = vmatprep.mubr.bf16.mxu0 0
        %1657 = vmatmul.mubr.bf16.gmra.mrb[0].mxu0 %v1514
        %v1658 = vpop.f32.mrb[0].mxu0
        %v1659 = vadd.f32 0.0, %v1658
        %v1660 = vpop.f32.mrb[0].mxu0
        %v1661 = vpop.f32.mrb[0].mxu0
        %v1662 = vadd.f32 0.0, %v1661
        %v1663 = vpop.f32.mrb[0].mxu0
        %1664 = vmatprep.mubr.bf16.mxu0 0
        %1665 = vmatmul.mubr.bf16.gmra.mrb[0].mxu0 %v1515
        %v1666 = vpop.f32.mrb[0].mxu0
        %v1667 = vadd.f32 0.0, %v1666
        %v1668 = vpop.f32.mrb[0].mxu0
        %v1669 = vpop.f32.mrb[0].mxu0
        %v1670 = vadd.f32 0.0, %v1669
        %v1671 = vpop.f32.mrb[0].mxu0
        %1672 = vmatprep.mubr.bf16.mxu0 0
        %1673 = vmatmul.mubr.bf16.gmra.mrb[0].mxu0 %v1516
        %v1674 = vpop.f32.mrb[0].mxu0
        %v1675 = vadd.f32 0.0, %v1674
        %v1676 = vpop.f32.mrb[0].mxu0
        %v1677 = vpop.f32.mrb[0].mxu0
        %v1678 = vadd.f32 0.0, %v1677
        %v1679 = vpop.f32.mrb[0].mxu0
        %1680 = vmatprep.mubr.bf16.mxu0 0
        %1681 = vmatmul.mubr.bf16.gmra.mrb[0].mxu0 %v1517
        %v1682 = vpop.f32.mrb[0].mxu0
        %v1683 = vadd.f32 0.0, %v1682
        %v1684 = vpop.f32.mrb[0].mxu0
        %v1685 = vpop.f32.mrb[0].mxu0
        %v1686 = vadd.f32 0.0, %v1685
        %v1687 = vpop.f32.mrb[0].mxu0
        %1688 = vmatprep.mubr.bf16.mxu0 0
        %1689 = vmatmul.mubr.bf16.gmra.mrb[0].mxu0 %v1518
        %v1690 = vpop.f32.mrb[0].mxu0
        %v1691 = vadd.f32 0.0, %v1690
        %v1692 = vpop.f32.mrb[0].mxu0
        %v1693 = vpop.f32.mrb[0].mxu0
        %v1694 = vadd.f32 0.0, %v1693
        %v1695 = vpop.f32.mrb[0].mxu0
        %1696 = vmatprep.mubr.bf16.mxu0 0
        %1697 = vmatmul.mubr.bf16.gmra.mrb[0].mxu0 %v1519
        %v1698 = vpop.f32.mrb[0].mxu0
        %v1699 = vadd.f32 0.0, %v1698
        %v1700 = vpop.f32.mrb[0].mxu0
        %v1701 = vpop.f32.mrb[0].mxu0
        %v1702 = vadd.f32 0.0, %v1701
        %v1703 = vpop.f32.mrb[0].mxu0
        %1704 = vmatprep.mubr.bf16.mxu0 0
        %1705 = vmatmul.mubr.bf16.gmra.mrb[0].mxu0 %v1520
        %v1706 = vpop.f32.mrb[0].mxu0
        %v1707 = vadd.f32 0.0, %v1706
        %v1708 = vpop.f32.mrb[0].mxu0
        %v1709 = vpop.f32.mrb[0].mxu0
        %v1710 = vadd.f32 0.0, %v1709
        %v1711 = vpop.f32.mrb[0].mxu0
        %1712 = vmatprep.mubr.bf16.mxu0 0
        %1713 = vmatmul.mubr.bf16.gmra.mrb[0].mxu0 %v1521
        %v1714 = vpop.f32.mrb[0].mxu0
        %v1715 = vadd.f32 0.0, %v1714
        %v1716 = vpop.f32.mrb[0].mxu0
        %v1717 = vpop.f32.mrb[0].mxu0
        %v1718 = vadd.f32 0.0, %v1717
        %v1719 = vpop.f32.mrb[0].mxu0
        %1720 = vmatprep.mubr.bf16.mxu0 0
        %1721 = vmatmul.mubr.bf16.gmra.mrb[0].mxu0 %v1522
        %v1722 = vpop.f32.mrb[0].mxu0
        %v1723 = vadd.f32 0.0, %v1722
        %v1724 = vpop.f32.mrb[0].mxu0
        %v1725 = vpop.f32.mrb[0].mxu0
        %v1726 = vadd.f32 0.0, %v1725
        %v1727 = vpop.f32.mrb[0].mxu0
        %1728 = vmatprep.mubr.bf16.mxu0 0
        %1729 = vmatmul.mubr.bf16.gmra.mrb[0].mxu0 %v1523
        %v1730 = vpop.f32.mrb[0].mxu0
        %v1731 = vadd.f32 0.0, %v1730
        %v1732 = vpop.f32.mrb[0].mxu0
        %v1733 = vpop.f32.mrb[0].mxu0
        %v1734 = vadd.f32 0.0, %v1733
        %v1735 = vpop.f32.mrb[0].mxu0
        %1736 = vmatprep.mubr.bf16.mxu0 0
        %1737 = vmatmul.mubr.bf16.gmra.mrb[0].mxu0 %v1524
        %v1738 = vpop.f32.mrb[0].mxu0
        %v1739 = vadd.f32 0.0, %v1738
        %v1740 = vpop.f32.mrb[0].mxu0
        %v1741 = vpop.f32.mrb[0].mxu0
        %v1742 = vadd.f32 0.0, %v1741
        %v1743 = vpop.f32.mrb[0].mxu0
        %1744 = vmatprep.mubr.bf16.mxu0 0
        %1745 = vmatmul.mubr.bf16.gmra.mrb[0].mxu0 %v1525
        %v1746 = vpop.f32.mrb[0].mxu0
        %v1747 = vadd.f32 0.0, %v1746
        %v1748 = vpop.f32.mrb[0].mxu0
        %v1749 = vpop.f32.mrb[0].mxu0
        %v1750 = vadd.f32 0.0, %v1749
        %v1751 = vpop.f32.mrb[0].mxu0
        %1752 = vmatprep.mubr.bf16.mxu0 0
        %1753 = vmatmul.mubr.bf16.gmra.mrb[0].mxu0 %v1526
        %v1754 = vpop.f32.mrb[0].mxu0
        %v1755 = vadd.f32 0.0, %v1754
        %v1756 = vpop.f32.mrb[0].mxu0
        %v1757 = vpop.f32.mrb[0].mxu0
        %v1758 = vadd.f32 0.0, %v1757
        %v1759 = vpop.f32.mrb[0].mxu0
        %1760 = vmatprep.mubr.bf16.mxu0 0
        %1761 = vmatmul.mubr.bf16.gmra.mrb[0].mxu0 %v1527
        %v1762 = vpop.f32.mrb[0].mxu0
        %v1763 = vadd.f32 0.0, %v1762
        %v1764 = vpop.f32.mrb[0].mxu0
        %v1765 = vpop.f32.mrb[0].mxu0
        %v1766 = vadd.f32 0.0, %v1765
        %v1767 = vpop.f32.mrb[0].mxu0
        %1768 = vmatprep.mubr.bf16.mxu0 0
        %1769 = vmatmul.mubr.bf16.gmra.mrb[0].mxu0 %v1528
        %v1770 = vpop.f32.mrb[0].mxu0
        %v1771 = vadd.f32 0.0, %v1770
        %v1772 = vpop.f32.mrb[0].mxu0
        %v1773 = vpop.f32.mrb[0].mxu0
        %v1774 = vadd.f32 0.0, %v1773
        %v1775 = vpop.f32.mrb[0].mxu0
        %1776 = vmatprep.mubr.bf16.mxu0 0
        %1777 = vmatmul.mubr.bf16.gmra.mrb[0].mxu0 %v1529
        %v1778 = vpop.f32.mrb[0].mxu0
        %v1779 = vadd.f32 0.0, %v1778
        %v1780 = vpop.f32.mrb[0].mxu0
        %v1781 = vpop.f32.mrb[0].mxu0
        %v1782 = vadd.f32 0.0, %v1781
        %v1783 = vpop.f32.mrb[0].mxu0
        %1784 = vmatprep.mubr.bf16.mxu0 0
        %1785 = vmatmul.mubr.bf16.gmra.mrb[0].mxu0 %v1530
        %v1786 = vpop.f32.mrb[0].mxu0
        %v1787 = vadd.f32 0.0, %v1786
        %v1788 = vpop.f32.mrb[0].mxu0
        %v1789 = vpop.f32.mrb[0].mxu0
        %v1790 = vadd.f32 0.0, %v1789
        %v1791 = vpop.f32.mrb[0].mxu0
        %1792 = vmatprep.mubr.bf16.mxu0 0
        %1793 = vmatmul.mubr.bf16.gmra.mrb[0].mxu0 %v1531
        %v1794 = vpop.f32.mrb[0].mxu0
        %v1795 = vadd.f32 0.0, %v1794
        %v1796 = vpop.f32.mrb[0].mxu0
        %v1797 = vpop.f32.mrb[0].mxu0
        %v1798 = vadd.f32 0.0, %v1797
        %v1799 = vpop.f32.mrb[0].mxu0
        %1800 = vmatprep.mubr.bf16.mxu0 0
        %1801 = vmatmul.mubr.bf16.gmra.mrb[0].mxu0 %v1532
        %v1802 = vpop.f32.mrb[0].mxu0
        %v1803 = vadd.f32 0.0, %v1802
        %v1804 = vpop.f32.mrb[0].mxu0
        %v1805 = vpop.f32.mrb[0].mxu0
        %v1806 = vadd.f32 0.0, %v1805
        %v1807 = vpop.f32.mrb[0].mxu0
        %1808 = vmatprep.mubr.bf16.mxu0 0
        %1809 = vmatmul.mubr.bf16.gmra.mrb[0].mxu0 %v1533
        %v1810 = vpop.f32.mrb[0].mxu0
        %v1811 = vadd.f32 0.0, %v1810
        %v1812 = vpop.f32.mrb[0].mxu0
        %v1813 = vpop.f32.mrb[0].mxu0
        %v1814 = vadd.f32 0.0, %v1813
        %v1815 = vpop.f32.mrb[0].mxu0
        %1816 = vmatprep.mubr.bf16.mxu0 0
        %1817 = vmatmul.mubr.bf16.gmra.mrb[0].mxu0 %v1534
        %v1818 = vpop.f32.mrb[0].mxu0
        %v1819 = vadd.f32 0.0, %v1818
        %v1820 = vpop.f32.mrb[0].mxu0
        %v1821 = vpop.f32.mrb[0].mxu0
        %v1822 = vadd.f32 0.0, %v1821
        %v1823 = vpop.f32.mrb[0].mxu0
        %1824 = vmatprep.mubr.bf16.mxu0 0
        %1825 = vmatmul.mubr.bf16.gmra.mrb[0].mxu0 %v1535
        %v1826 = vpop.f32.mrb[0].mxu0
        %v1827 = vadd.f32 0.0, %v1826
        %v1828 = vpop.f32.mrb[0].mxu0
        %v1829 = vpop.f32.mrb[0].mxu0
        %v1830 = vadd.f32 0.0, %v1829
        %v1831 = vpop.f32.mrb[0].mxu0
        %1832 = vmatprep.mubr.bf16.mxu0 0
        %1833 = vmatmul.mubr.bf16.gmra.mrb[0].mxu0 %v1536
        %v1834 = vpop.f32.mrb[0].mxu0
        %v1835 = vadd.f32 0.0, %v1834
        %v1836 = vpop.f32.mrb[0].mxu0
        %v1837 = vpop.f32.mrb[0].mxu0
        %v1838 = vadd.f32 0.0, %v1837
        %v1839 = vpop.f32.mrb[0].mxu0
        %1840 = vmatprep.mubr.bf16.mxu0 0
        %1841 = vmatmul.mubr.bf16.gmra.mrb[0].mxu0 %v1537
        %v1842 = vpop.f32.mrb[0].mxu0
        %v1843 = vadd.f32 0.0, %v1842
        %v1844 = vpop.f32.mrb[0].mxu0
        %v1845 = vpop.f32.mrb[0].mxu0
        %v1846 = vadd.f32 0.0, %v1845
        %v1847 = vpop.f32.mrb[0].mxu0
        %1848 = vmatprep.mubr.bf16.mxu0 0
        %1849 = vmatmul.mubr.bf16.gmra.mrb[0].mxu0 %v1538
        %v1850 = vpop.f32.mrb[0].mxu0
        %v1851 = vadd.f32 0.0, %v1850
        %v1852 = vpop.f32.mrb[0].mxu0
        %v1853 = vpop.f32.mrb[0].mxu0
        %v1854 = vadd.f32 0.0, %v1853
        %v1855 = vpop.f32.mrb[0].mxu0
        %1856 = vmatprep.mubr.bf16.mxu0 0
        %1857 = vmatmul.mubr.bf16.gmra.mrb[0].mxu0 %v1539
        %v1858 = vpop.f32.mrb[0].mxu0
        %v1859 = vadd.f32 0.0, %v1858
        %v1860 = vpop.f32.mrb[0].mxu0
        %v1861 = vpop.f32.mrb[0].mxu0
        %v1862 = vadd.f32 0.0, %v1861
        %v1863 = vpop.f32.mrb[0].mxu0
        %1864 = vmatprep.mubr.bf16.mxu0 0
        %1865 = vmatmul.mubr.bf16.gmra.mrb[0].mxu0 %v1540
        %v1866 = vpop.f32.mrb[0].mxu0
        %v1867 = vadd.f32 0.0, %v1866
        %v1868 = vpop.f32.mrb[0].mxu0
        %v1869 = vpop.f32.mrb[0].mxu0
        %v1870 = vadd.f32 0.0, %v1869
        %v1871 = vpop.f32.mrb[0].mxu0
        %1872 = vmatprep.mubr.bf16.mxu0 0
        %1873 = vmatmul.mubr.bf16.gmra.mrb[0].mxu0 %v1541
        %v1874 = vpop.f32.mrb[0].mxu0
        %v1875 = vadd.f32 0.0, %v1874
        %v1876 = vpop.f32.mrb[0].mxu0
        %v1877 = vpop.f32.mrb[0].mxu0
        %v1878 = vadd.f32 0.0, %v1877
        %v1879 = vpop.f32.mrb[0].mxu0
        %1880 = vmatprep.mubr.bf16.mxu0 0
        %1881 = vmatmul.mubr.bf16.gmra.mrb[0].mxu0 %v1542
        %v1882 = vpop.f32.mrb[0].mxu0
        %v1883 = vadd.f32 0.0, %v1882
        %v1884 = vpop.f32.mrb[0].mxu0
        %v1885 = vpop.f32.mrb[0].mxu0
        %v1886 = vadd.f32 0.0, %v1885
        %v1887 = vpop.f32.mrb[0].mxu0
        %1888 = vmatprep.mubr.bf16.mxu0 0
        %1889 = vmatmul.mubr.bf16.gmra.mrb[0].mxu0 %v1543
        %v1890 = vpop.f32.mrb[0].mxu0
        %v1891 = vadd.f32 0.0, %v1890
        %v1892 = vpop.f32.mrb[0].mxu0
        %v1893 = vpop.f32.mrb[0].mxu0
        %v1894 = vadd.f32 0.0, %v1893
        %v1895 = vpop.f32.mrb[0].mxu0
        %1896 = vdwg.mxu0
        %1897 = vst [vmem:[%s269] sm:$0xff] %v1643
        %1898 = vst [vmem:[%s269 + $0x8] sm:$0xff] %v1646
        %1899 = vst [vmem:[%s269 + $0x10] sm:$0xff] %v1651
        %1900 = vst [vmem:[%s269 + $0x18] sm:$0xff] %v1654
        %1901 = vst [vmem:[%s269 + $0x20] sm:$0xff] %v1659
        %1902 = vst [vmem:[%s269 + $0x28] sm:$0xff] %v1662
        %1903 = vst [vmem:[%s269 + $0x30] sm:$0xff] %v1667
        %1904 = vst [vmem:[%s269 + $0x38] sm:$0xff] %v1670
        %1905 = vst [vmem:[%s269 + $0x40] sm:$0xff] %v1675
        %1906 = vst [vmem:[%s269 + $0x48] sm:$0xff] %v1678
        %1907 = vst [vmem:[%s269 + $0x50] sm:$0xff] %v1683
        %1908 = vst [vmem:[%s269 + $0x58] sm:$0xff] %v1686
        %1909 = vst [vmem:[%s269 + $0x60] sm:$0xff] %v1691
        %1910 = vst [vmem:[%s269 + $0x68] sm:$0xff] %v1694
        %1911 = vst [vmem:[%s269 + $0x70] sm:$0xff] %v1699
        %1912 = vst [vmem:[%s269 + $0x78] sm:$0xff] %v1702
        %1913 = vst [vmem:[%s269 + $0x80] sm:$0xff] %v1707
        %1914 = vst [vmem:[%s269 + $0x88] sm:$0xff] %v1710
        %1915 = vst [vmem:[%s269 + $0x90] sm:$0xff] %v1715
        %1916 = vst [vmem:[%s269 + $0x98] sm:$0xff] %v1718
        %1917 = vst [vmem:[%s269 + $0xa0] sm:$0xff] %v1723
        %1918 = vst [vmem:[%s269 + $0xa8] sm:$0xff] %v1726
        %1919 = vst [vmem:[%s269 + $0xb0] sm:$0xff] %v1731
        %1920 = vst [vmem:[%s269 + $0xb8] sm:$0xff] %v1734
        %1921 = vst [vmem:[%s269 + $0xc0] sm:$0xff] %v1739
        %1922 = vst [vmem:[%s269 + $0xc8] sm:$0xff] %v1742
        %1923 = vst [vmem:[%s269 + $0xd0] sm:$0xff] %v1747
        %1924 = vst [vmem:[%s269 + $0xd8] sm:$0xff] %v1750
        %1925 = vst [vmem:[%s269 + $0xe0] sm:$0xff] %v1755
        %1926 = vst [vmem:[%s269 + $0xe8] sm:$0xff] %v1758
        %1927 = vst [vmem:[%s269 + $0xf0] sm:$0xff] %v1763
        %1928 = vst [vmem:[%s269 + $0xf8] sm:$0xff] %v1766
        %1929 = vst [vmem:[%s269 + $0x100] sm:$0xff] %v1771
        %1930 = vst [vmem:[%s269 + $0x108] sm:$0xff] %v1774
        %1931 = vst [vmem:[%s269 + $0x110] sm:$0xff] %v1779
        %1932 = vst [vmem:[%s269 + $0x118] sm:$0xff] %v1782
        %1933 = vst [vmem:[%s269 + $0x120] sm:$0xff] %v1787
        %1934 = vst [vmem:[%s269 + $0x128] sm:$0xff] %v1790
        %1935 = vst [vmem:[%s269 + $0x130] sm:$0xff] %v1795
        %1936 = vst [vmem:[%s269 + $0x138] sm:$0xff] %v1798
        %1937 = vst [vmem:[%s269 + $0x140] sm:$0xff] %v1803
        %1938 = vst [vmem:[%s269 + $0x148] sm:$0xff] %v1806
        %1939 = vst [vmem:[%s269 + $0x150] sm:$0xff] %v1811
        %1940 = vst [vmem:[%s269 + $0x158] sm:$0xff] %v1814
        %1941 = vst [vmem:[%s269 + $0x160] sm:$0xff] %v1819
        %1942 = vst [vmem:[%s269 + $0x168] sm:$0xff] %v1822
        %1943 = vst [vmem:[%s269 + $0x170] sm:$0xff] %v1827
        %1944 = vst [vmem:[%s269 + $0x178] sm:$0xff] %v1830
        %1945 = vst [vmem:[%s269 + $0x180] sm:$0xff] %v1835
        %1946 = vst [vmem:[%s269 + $0x188] sm:$0xff] %v1838
        %1947 = vst [vmem:[%s269 + $0x190] sm:$0xff] %v1843
        %1948 = vst [vmem:[%s269 + $0x198] sm:$0xff] %v1846
        %1949 = vst [vmem:[%s269 + $0x1a0] sm:$0xff] %v1851
        %1950 = vst [vmem:[%s269 + $0x1a8] sm:$0xff] %v1854
        %1951 = vst [vmem:[%s269 + $0x1b0] sm:$0xff] %v1859
        %1952 = vst [vmem:[%s269 + $0x1b8] sm:$0xff] %v1862
        %1953 = vst [vmem:[%s269 + $0x1c0] sm:$0xff] %v1867
        %1954 = vst [vmem:[%s269 + $0x1c8] sm:$0xff] %v1870
        %1955 = vst [vmem:[%s269 + $0x1d0] sm:$0xff] %v1875
        %1956 = vst [vmem:[%s269 + $0x1d8] sm:$0xff] %v1878
        %1957 = vst [vmem:[%s269 + $0x1e0] sm:$0xff] %v1883
        %1958 = vst [vmem:[%s269 + $0x1e8] sm:$0xff] %v1886
        %1959 = vst [vmem:[%s269 + $0x1f0] sm:$0xff] %v1891
        %1960 = vst [vmem:[%s269 + $0x1f8] sm:$0xff] %v1894
        %s1961 = sand.u32 %s119, 1
        %s1962 = scalar_lea.sflag [#allocation6], %s1961
        %s1963 = sand.u32 %s119, 1
        %s1964 = smul.addr %s1963, 512
        %s1965 = scalar_lea.vmem [#allocation10], %s1964
        // Predicated region
        $region49: #{tpu_custom_call.1} parent=35 // pred_check
          %p1966 = pneg %p129
        $region50: #{tpu_custom_call.1} parent=35 // pred_check_branch
          %1968 = sbr.rel (%p1966) target = $region52
        $region51: #{tpu_custom_call.1} parent=35 // pred_region
          #allocation14 [shape = 'u32[6]{0}', space=smem, size = 0x18, scoped, tag = 'DMA stride descriptor']
          %s1969 = smul.u32 16, %s22
          %s1971 = ssub.s32 8192, 8192
          %1972 = vsyncadd %s1962, %s1971
          %s1973 = smul.addr %s1969, 128
          %s1974 = scalar_lea.hbm %s4, %s1973
          %s1976 = sshll.u32 1, 14
          %s1977 = sxor.u32 4294967295, %s1976
          %s1980 = sshll.u32 7, 18
          %s1981 = sxor.u32 4294967295, %s1980
          %s1982 = sand.u32 0, %s1981
          %s1984 = sor.u32 %s1982, 0
          %s1986 = sshll.u32 3, 24
          %s1987 = sxor.u32 4294967295, %s1986
          %s1988 = sand.u32 %s1984, %s1987
          %s1990 = sor.u32 %s1988, 0
          %s1991 = sshll.u32 %s1965, 4
          %s1992 = int_to_ptr.vmem [resolvable:$true] %s1991
          %1998 = sst [smem:[#allocation14]] 2048
          %s1999 = scalar_lea.smem [#allocation14], 1
          %2000 = sst [smem:[%s1999]] 8192
          %s2001 = scalar_lea.smem [#allocation14], 2
          %2002 = sst [smem:[%s2001]] 16
          %s2003 = scalar_lea.smem [#allocation14], 3
          %2004 = sst [smem:[%s2003]] 128
          %s2005 = scalar_lea.smem [#allocation14], 4
          %2006 = sst [smem:[%s2005]] 128
          %s2007 = scalar_lea.smem [#allocation14], 5
          %2008 = sst [smem:[%s2007]] 8
          %2010 = dma.general %s1992, 8192, %s1974, %s1962, [#allocation13], [#allocation14], %s1990, 0
        $region52: #{tpu_custom_call.1} parent=35 // pred_fallthru
          _
      $region36: #{tpu_custom_call.1} parent=5 // pred_fallthru
        _
      %p2011 = scmp.le.s32.totalorder 2, %s17
      // Predicated region
      $region53: #{tpu_custom_call.1} parent=5 // pred_check
        %p2012 = pneg %p2011
      $region54: #{tpu_custom_call.1} parent=5 // pred_check_branch
        %2014 = sbr.rel (%p2012) target = $region56
      $region55: #{tpu_custom_call.1} parent=5 // pred_region
        %s2015 = ssub.s32 %s17, 2
        // Predicated region
        $region57: #{tpu_custom_call.1} parent=55 // pred_check
          %p2016 = pneg %p135
        $region58: #{tpu_custom_call.1} parent=55 // pred_check_branch
          %2018 = sbr.rel (%p2016) target = $region60
        $region59: #{tpu_custom_call.1} parent=55 // pred_region
          %s2019 = sand.u32 %s120, 1
          %s2020 = scalar_lea.sflag [#allocation6], %s2019
          %s2021 = sand.u32 %s120, 1
          %s2022 = smul.addr %s2021, 512
          %s2023 = scalar_lea.vmem [#allocation10], %s2022
          %2024 = dma.done %s2020, 8192
        $region60: #{tpu_custom_call.1} parent=55 // pred_fallthru
          _
      $region56: #{tpu_custom_call.1} parent=5 // pred_fallthru
        _
    $region6: #{tpu_custom_call.1} parent=1 // loop_footer
      %s21 = sadd.s32 1, %s17
    $region7: #{tpu_custom_call.1} parent=1 // loop_footer_branch
      %16 = sbr.rel target = $region3
    $region8: #{tpu_custom_call.1} parent=1 // loop_exit
      _
    %2025 = vsyncpa [#allocation5], 1
    %s2026 = scalar_lea.sflag [#allocation5], 1
    %2027 = vsyncpa %s2026, 1
    %2028 = vsyncpa [#allocation8], 1
    %2029 = vsyncpa [#allocation6], 1
    %s2030 = scalar_lea.sflag [#allocation6], 1
    %2031 = vsyncpa %s2030, 1

</llo_original>
